<compile_context>
chip_gen: v6e
topology: v6e:2x2x1
jax: 0.10.0
libtpu: 0.0.40
codegen_flags: <defaults>
</compile_context>

<pallas_src>
import functools

import jax
import jax.numpy as jnp
import numpy as np
from jax import lax
from jax.experimental import pallas as pl
from jax.experimental.pallas import tpu as pltpu


# ----------------------------------------------------------------------------
# Kernel: one invocation, fully-unrolled 8-step recurrence + fused head.
# ----------------------------------------------------------------------------
def lstm_encoder_kernel(gx_ref, whh_ref, hw_ref, hb_ref, out_ref,
                        *, seq_len, batch, hidden_p):
    S, B, H = seq_len, batch, hidden_p            # H is the padded hidden (128)

    h = jnp.zeros((B, H), jnp.float32)            # recurrent state lives in vregs
    c = jnp.zeros((B, H), jnp.float32)

    # Fully-unrolled recurrence (S is small and static).  gx rows for step t
    # are a static, sublane-aligned slice (B == 8); the four gate views are
    # full-vreg, lane-aligned 128-wide slices thanks to the H->128 padding.
    # TODO(synk): if bundle dumps show Mosaic re-pushing W_hh every step,
    # switch to pltpu.matmul_push_rhs / matmul_acc_lhs / matmul_pop to hold
    # W_hh resident in the MXU across the 8 steps.
    for t in range(S):
        gates = gx_ref[t * B:(t + 1) * B, :] + jnp.dot(
            h, whh_ref[...], preferred_element_type=jnp.float32)   # (B, 4H)
        i_g = jax.nn.sigmoid(gates[:, 0 * H:1 * H])
        f_g = jax.nn.sigmoid(gates[:, 1 * H:2 * H])
        g_g = jnp.tanh(gates[:, 2 * H:3 * H])
        o_g = jax.nn.sigmoid(gates[:, 3 * H:4 * H])
        c = f_g * c + i_g * g_g
        h = o_g * jnp.tanh(c)

    # hn == output[-1]; dropout identity in eval; fc+mu fused wrapper-side.
    out_ref[...] = (jnp.dot(h, hw_ref[...], preferred_element_type=jnp.float32)
                    + hb_ref[...]).astype(out_ref.dtype)


# ----------------------------------------------------------------------------
# Parameter-load-time preparation (run once, NOT per call).
# ----------------------------------------------------------------------------
def prepare_params(params):
    """Pads H -> multiple of 128, folds biases, fuses heads, precomputes the
    embedding+input-projection table. Exact (zero padding, no approximation)."""
    H = params["w_hh"].shape[1]                     # LSTM hidden size (64)
    Hp = max(128, ((H + 127) // 128) * 128)         # padded hidden size (128)
    pad = Hp - H

    def pad_gate_cols(w):                           # (..., 4H) -> (..., 4Hp)
        blocks = jnp.split(w, 4, axis=-1)           # PyTorch gate order i,f,g,o
        widths = [(0, 0)] * (w.ndim - 1) + [(0, pad)]
        return jnp.concatenate([jnp.pad(b, widths) for b in blocks], axis=-1)

    wih_tp = pad_gate_cols(params["w_ih"].T)                        # (E, 4Hp)
    bias_p = pad_gate_cols((params["b_ih"] + params["b_hh"])[None]) # (1, 4Hp)
    whh_tp = jnp.pad(pad_gate_cols(params["w_hh"].T),
                     ((0, pad), (0, 0)))                            # (Hp, 4Hp)

    # Embedding gather + input projection + bias, all as one lookup table.
    table = params["embedding"] @ wih_tp + bias_p                   # (voc, 4Hp)

    # Fused fc -> mu head (no nonlinearity between them in eval mode).
    fcw_tp = jnp.pad(params["fc_w"].T, ((0, pad), (0, 0)))          # (Hp, Dh)
    head_w = fcw_tp @ params["mu_w"].T                              # (Hp, out)
    head_b = (params["fc_b"] @ params["mu_w"].T
              + params["mu_b"])[None, :]                            # (1, out)

    return {"table": jnp.asarray(table, jnp.float32),
            "whh": jnp.asarray(whh_tp, jnp.float32),
            "head_w": jnp.asarray(head_w, jnp.float32),
            "head_b": jnp.asarray(head_b, jnp.float32)}


# ----------------------------------------------------------------------------
# Per-call forward (jitted): one gather + one pallas_call.
# ----------------------------------------------------------------------------
@jax.jit
def lstm_encoder_forward(text, prep):
    """text: (seq, batch) int32 ids -> mu: (batch, out_dim) float32."""
    S, B = text.shape
    Hp = prep["whh"].shape[0]
    out_dim = prep["head_w"].shape[1]

    # Gather precomputed per-token gate pre-activations (bias already folded).
    # TODO(synk): could move this gather in-kernel (scalar-prefetched ids +
    # table in VMEM) to drop the last non-Pallas op; kept here for robustness.
    gx = jnp.take(prep["table"], text.reshape(-1), axis=0)          # (S*B, 4Hp)

    kernel = functools.partial(lstm_encoder_kernel,
                               seq_len=S, batch=B, hidden_p=Hp)
    vmem = pltpu.MemorySpace.VMEM
    return pl.pallas_call(
        kernel,
        out_shape=jax.ShapeDtypeStruct((B, out_dim), jnp.float32),
        in_specs=[pl.BlockSpec(memory_space=vmem)] * 4,   # whole arrays in VMEM
        out_specs=pl.BlockSpec(memory_space=vmem),
    )(gx, prep["whh"], prep["head_w"], prep["head_b"])


# ----------------------------------------------------------------------------
# Pure-JAX reference (unpadded, unfused) for correctness check.
# ----------------------------------------------------------------------------
def reference_forward(text, params):
    embedded = jnp.take(params["embedding"], text, axis=0)
    H = params["w_hh"].shape[1]
    B = embedded.shape[1]

    def step(carry, x_t):
        h, c = carry
        gates = (x_t @ params["w_ih"].T + params["b_ih"]
                 + h @ params["w_hh"].T + params["b_hh"])
        i_g = jax.nn.sigmoid(gates[:, 0 * H:1 * H])
        f_g = jax.nn.sigmoid(gates[:, 1 * H:2 * H])
        g_g = jnp.tanh(gates[:, 2 * H:3 * H])
        o_g = jax.nn.sigmoid(gates[:, 3 * H:4 * H])
        c = f_g * c + i_g * g_g
        h = o_g * jnp.tanh(c)
        return (h, c), None

    (h, _), _ = lax.scan(step, (jnp.zeros((B, H)), jnp.zeros((B, H))), embedded)
    enc = h @ params["fc_w"].T + params["fc_b"]
    return enc @ params["mu_w"].T + params["mu_b"]


if __name__ == "__main__":
    # Config mirroring lstm_encoder(voc_size, embedding_dim, out_dim):
    voc_size, embedding_dim, out_dim = 50, 32, 16
    hidden_dim = out_dim * 2                 # 32
    H = hidden_dim * 2                       # LSTM hidden size = 64
    seq_len, batch = 8, 8

    key = jax.random.PRNGKey(0)
    ks = jax.random.split(key, 10)
    scale = 0.1
    params = {
        "embedding": scale * jax.random.normal(ks[0], (voc_size, embedding_dim), jnp.float32),
        "w_ih": scale * jax.random.normal(ks[1], (4 * H, embedding_dim), jnp.float32),
        "w_hh": scale * jax.random.normal(ks[2], (4 * H, H), jnp.float32),
        "b_ih": scale * jax.random.normal(ks[3], (4 * H,), jnp.float32),
        "b_hh": scale * jax.random.normal(ks[4], (4 * H,), jnp.float32),
        "fc_w": scale * jax.random.normal(ks[5], (hidden_dim, H), jnp.float32),
        "fc_b": scale * jax.random.normal(ks[6], (hidden_dim,), jnp.float32),
        "mu_w": scale * jax.random.normal(ks[7], (out_dim, hidden_dim), jnp.float32),
        "mu_b": scale * jax.random.normal(ks[8], (out_dim,), jnp.float32),
    }
    text = jax.random.randint(ks[9], (seq_len, batch), 0, voc_size, jnp.int32)

    prep = prepare_params(params)            # parameter-load-time glue
    mu = jax.block_until_ready(lstm_encoder_forward(text, prep))

    ref = jax.block_until_ready(reference_forward(text, params))
    np.testing.assert_allclose(np.asarray(mu), np.asarray(ref), rtol=1e-4, atol=2e-5)

    # TODO(synk): info_model=True eval branch uses torch.randn_like (host RNG);
    # the default info_model=False path (return mu) is implemented here.
    print("KERNEL_OK")
</pallas_src>

<mosaic_0001>
module attributes {stable_mosaic.version = 11 : i64} {
  func.func @lstm_encoder_kernel(%arg0: memref<64x512xf32, #tpu.memory_space<vmem>>, %arg1: memref<128x512xf32, #tpu.memory_space<vmem>>, %arg2: memref<128x16xf32, #tpu.memory_space<vmem>>, %arg3: memref<1x16xf32, #tpu.memory_space<vmem>>, %arg4: memref<8x16xf32, #tpu.memory_space<vmem>>) attributes {dimension_semantics = [], scalar_prefetch = 0 : i64, scratch_operands = 0 : i64, tpu.core_type = #tpu.core_type<tc>} {
    %cst = arith.constant 0.000000e+00 : f32
    %0 = vector.broadcast %cst : f32 to vector<8x128xf32>
    %cst_0 = arith.constant 0.000000e+00 : f32
    %1 = vector.broadcast %cst_0 : f32 to vector<8x128xf32>
    %c0 = arith.constant 0 : index
    %c0_1 = arith.constant 0 : index
    %2 = vector.load %arg0[%c0, %c0_1] : memref<64x512xf32, #tpu.memory_space<vmem>>, vector<8x512xf32>
    %c0_2 = arith.constant 0 : index
    %c0_3 = arith.constant 0 : index
    %3 = vector.load %arg1[%c0_2, %c0_3] : memref<128x512xf32, #tpu.memory_space<vmem>>, vector<128x512xf32>
    %cst_4 = arith.constant dense<0.000000e+00> : vector<8x512xf32>
    %4 = tpu.matmul %0, %3, %cst_4 {dimension_numbers = #tpu.dot_dimension_numbers<[1], [0], [0], [1], [0, 0, 1, 1], [], []>} : vector<8x128xf32>, vector<128x512xf32>, vector<8x512xf32> -> vector<8x512xf32>
    %5 = arith.addf %2, %4 : vector<8x512xf32>
    %6 = vector.extract_strided_slice %5 {offsets = [0, 0], sizes = [8, 128], strides = [1, 1]} : vector<8x512xf32> to vector<8x128xf32>
    %7 = arith.negf %6 : vector<8x128xf32>
    %8 = math.exp %7 : vector<8x128xf32>
    %cst_5 = arith.constant 1.000000e+00 : f32
    %9 = vector.broadcast %cst_5 : f32 to vector<8x128xf32>
    %10 = arith.addf %9, %8 : vector<8x128xf32>
    %11 = arith.divf %9, %10 : vector<8x128xf32>
    %12 = vector.extract_strided_slice %5 {offsets = [0, 128], sizes = [8, 128], strides = [1, 1]} : vector<8x512xf32> to vector<8x128xf32>
    %13 = arith.negf %12 : vector<8x128xf32>
    %14 = math.exp %13 : vector<8x128xf32>
    %cst_6 = arith.constant 1.000000e+00 : f32
    %15 = vector.broadcast %cst_6 : f32 to vector<8x128xf32>
    %16 = arith.addf %15, %14 : vector<8x128xf32>
    %17 = arith.divf %15, %16 : vector<8x128xf32>
    %18 = vector.extract_strided_slice %5 {offsets = [0, 256], sizes = [8, 128], strides = [1, 1]} : vector<8x512xf32> to vector<8x128xf32>
    %19 = math.tanh %18 : vector<8x128xf32>
    %20 = vector.extract_strided_slice %5 {offsets = [0, 384], sizes = [8, 128], strides = [1, 1]} : vector<8x512xf32> to vector<8x128xf32>
    %21 = arith.negf %20 : vector<8x128xf32>
    %22 = math.exp %21 : vector<8x128xf32>
    %cst_7 = arith.constant 1.000000e+00 : f32
    %23 = vector.broadcast %cst_7 : f32 to vector<8x128xf32>
    %24 = arith.addf %23, %22 : vector<8x128xf32>
    %25 = arith.divf %23, %24 : vector<8x128xf32>
    %26 = arith.mulf %17, %1 : vector<8x128xf32>
    %27 = arith.mulf %11, %19 : vector<8x128xf32>
    %28 = arith.addf %26, %27 : vector<8x128xf32>
    %29 = math.tanh %28 : vector<8x128xf32>
    %30 = arith.mulf %25, %29 : vector<8x128xf32>
    %c8 = arith.constant 8 : index
    %c0_8 = arith.constant 0 : index
    %31 = vector.load %arg0[%c8, %c0_8] : memref<64x512xf32, #tpu.memory_space<vmem>>, vector<8x512xf32>
    %c0_9 = arith.constant 0 : index
    %c0_10 = arith.constant 0 : index
    %32 = vector.load %arg1[%c0_9, %c0_10] : memref<128x512xf32, #tpu.memory_space<vmem>>, vector<128x512xf32>
    %cst_11 = arith.constant dense<0.000000e+00> : vector<8x512xf32>
    %33 = tpu.matmul %30, %32, %cst_11 {dimension_numbers = #tpu.dot_dimension_numbers<[1], [0], [0], [1], [0, 0, 1, 1], [], []>} : vector<8x128xf32>, vector<128x512xf32>, vector<8x512xf32> -> vector<8x512xf32>
    %34 = arith.addf %31, %33 : vector<8x512xf32>
    %35 = vector.extract_strided_slice %34 {offsets = [0, 0], sizes = [8, 128], strides = [1, 1]} : vector<8x512xf32> to vector<8x128xf32>
    %36 = arith.negf %35 : vector<8x128xf32>
    %37 = math.exp %36 : vector<8x128xf32>
    %cst_12 = arith.constant 1.000000e+00 : f32
    %38 = vector.broadcast %cst_12 : f32 to vector<8x128xf32>
    %39 = arith.addf %38, %37 : vector<8x128xf32>
    %40 = arith.divf %38, %39 : vector<8x128xf32>
    %41 = vector.extract_strided_slice %34 {offsets = [0, 128], sizes = [8, 128], strides = [1, 1]} : vector<8x512xf32> to vector<8x128xf32>
    %42 = arith.negf %41 : vector<8x128xf32>
    %43 = math.exp %42 : vector<8x128xf32>
    %cst_13 = arith.constant 1.000000e+00 : f32
    %44 = vector.broadcast %cst_13 : f32 to vector<8x128xf32>
    %45 = arith.addf %44, %43 : vector<8x128xf32>
    %46 = arith.divf %44, %45 : vector<8x128xf32>
    %47 = vector.extract_strided_slice %34 {offsets = [0, 256], sizes = [8, 128], strides = [1, 1]} : vector<8x512xf32> to vector<8x128xf32>
    %48 = math.tanh %47 : vector<8x128xf32>
    %49 = vector.extract_strided_slice %34 {offsets = [0, 384], sizes = [8, 128], strides = [1, 1]} : vector<8x512xf32> to vector<8x128xf32>
    %50 = arith.negf %49 : vector<8x128xf32>
    %51 = math.exp %50 : vector<8x128xf32>
    %cst_14 = arith.constant 1.000000e+00 : f32
    %52 = vector.broadcast %cst_14 : f32 to vector<8x128xf32>
    %53 = arith.addf %52, %51 : vector<8x128xf32>
    %54 = arith.divf %52, %53 : vector<8x128xf32>
    %55 = arith.mulf %46, %28 : vector<8x128xf32>
    %56 = arith.mulf %40, %48 : vector<8x128xf32>
    %57 = arith.addf %55, %56 : vector<8x128xf32>
    %58 = math.tanh %57 : vector<8x128xf32>
    %59 = arith.mulf %54, %58 : vector<8x128xf32>
    %c16 = arith.constant 16 : index
    %c0_15 = arith.constant 0 : index
    %60 = vector.load %arg0[%c16, %c0_15] : memref<64x512xf32, #tpu.memory_space<vmem>>, vector<8x512xf32>
    %c0_16 = arith.constant 0 : index
    %c0_17 = arith.constant 0 : index
    %61 = vector.load %arg1[%c0_16, %c0_17] : memref<128x512xf32, #tpu.memory_space<vmem>>, vector<128x512xf32>
    %cst_18 = arith.constant dense<0.000000e+00> : vector<8x512xf32>
    %62 = tpu.matmul %59, %61, %cst_18 {dimension_numbers = #tpu.dot_dimension_numbers<[1], [0], [0], [1], [0, 0, 1, 1], [], []>} : vector<8x128xf32>, vector<128x512xf32>, vector<8x512xf32> -> vector<8x512xf32>
    %63 = arith.addf %60, %62 : vector<8x512xf32>
    %64 = vector.extract_strided_slice %63 {offsets = [0, 0], sizes = [8, 128], strides = [1, 1]} : vector<8x512xf32> to vector<8x128xf32>
    %65 = arith.negf %64 : vector<8x128xf32>
    %66 = math.exp %65 : vector<8x128xf32>
    %cst_19 = arith.constant 1.000000e+00 : f32
    %67 = vector.broadcast %cst_19 : f32 to vector<8x128xf32>
    %68 = arith.addf %67, %66 : vector<8x128xf32>
    %69 = arith.divf %67, %68 : vector<8x128xf32>
    %70 = vector.extract_strided_slice %63 {offsets = [0, 128], sizes = [8, 128], strides = [1, 1]} : vector<8x512xf32> to vector<8x128xf32>
    %71 = arith.negf %70 : vector<8x128xf32>
    %72 = math.exp %71 : vector<8x128xf32>
    %cst_20 = arith.constant 1.000000e+00 : f32
    %73 = vector.broadcast %cst_20 : f32 to vector<8x128xf32>
    %74 = arith.addf %73, %72 : vector<8x128xf32>
    %75 = arith.divf %73, %74 : vector<8x128xf32>
    %76 = vector.extract_strided_slice %63 {offsets = [0, 256], sizes = [8, 128], strides = [1, 1]} : vector<8x512xf32> to vector<8x128xf32>
    %77 = math.tanh %76 : vector<8x128xf32>
    %78 = vector.extract_strided_slice %63 {offsets = [0, 384], sizes = [8, 128], strides = [1, 1]} : vector<8x512xf32> to vector<8x128xf32>
    %79 = arith.negf %78 : vector<8x128xf32>
    %80 = math.exp %79 : vector<8x128xf32>
    %cst_21 = arith.constant 1.000000e+00 : f32
    %81 = vector.broadcast %cst_21 : f32 to vector<8x128xf32>
    %82 = arith.addf %81, %80 : vector<8x128xf32>
    %83 = arith.divf %81, %82 : vector<8x128xf32>
    %84 = arith.mulf %75, %57 : vector<8x128xf32>
    %85 = arith.mulf %69, %77 : vector<8x128xf32>
    %86 = arith.addf %84, %85 : vector<8x128xf32>
    %87 = math.tanh %86 : vector<8x128xf32>
    %88 = arith.mulf %83, %87 : vector<8x128xf32>
    %c24 = arith.constant 24 : index
    %c0_22 = arith.constant 0 : index
    %89 = vector.load %arg0[%c24, %c0_22] : memref<64x512xf32, #tpu.memory_space<vmem>>, vector<8x512xf32>
    %c0_23 = arith.constant 0 : index
    %c0_24 = arith.constant 0 : index
    %90 = vector.load %arg1[%c0_23, %c0_24] : memref<128x512xf32, #tpu.memory_space<vmem>>, vector<128x512xf32>
    %cst_25 = arith.constant dense<0.000000e+00> : vector<8x512xf32>
    %91 = tpu.matmul %88, %90, %cst_25 {dimension_numbers = #tpu.dot_dimension_numbers<[1], [0], [0], [1], [0, 0, 1, 1], [], []>} : vector<8x128xf32>, vector<128x512xf32>, vector<8x512xf32> -> vector<8x512xf32>
    %92 = arith.addf %89, %91 : vector<8x512xf32>
    %93 = vector.extract_strided_slice %92 {offsets = [0, 0], sizes = [8, 128], strides = [1, 1]} : vector<8x512xf32> to vector<8x128xf32>
    %94 = arith.negf %93 : vector<8x128xf32>
    %95 = math.exp %94 : vector<8x128xf32>
    %cst_26 = arith.constant 1.000000e+00 : f32
    %96 = vector.broadcast %cst_26 : f32 to vector<8x128xf32>
    %97 = arith.addf %96, %95 : vector<8x128xf32>
    %98 = arith.divf %96, %97 : vector<8x128xf32>
    %99 = vector.extract_strided_slice %92 {offsets = [0, 128], sizes = [8, 128], strides = [1, 1]} : vector<8x512xf32> to vector<8x128xf32>
    %100 = arith.negf %99 : vector<8x128xf32>
    %101 = math.exp %100 : vector<8x128xf32>
    %cst_27 = arith.constant 1.000000e+00 : f32
    %102 = vector.broadcast %cst_27 : f32 to vector<8x128xf32>
    %103 = arith.addf %102, %101 : vector<8x128xf32>
    %104 = arith.divf %102, %103 : vector<8x128xf32>
    %105 = vector.extract_strided_slice %92 {offsets = [0, 256], sizes = [8, 128], strides = [1, 1]} : vector<8x512xf32> to vector<8x128xf32>
    %106 = math.tanh %105 : vector<8x128xf32>
    %107 = vector.extract_strided_slice %92 {offsets = [0, 384], sizes = [8, 128], strides = [1, 1]} : vector<8x512xf32> to vector<8x128xf32>
    %108 = arith.negf %107 : vector<8x128xf32>
    %109 = math.exp %108 : vector<8x128xf32>
    %cst_28 = arith.constant 1.000000e+00 : f32
    %110 = vector.broadcast %cst_28 : f32 to vector<8x128xf32>
    %111 = arith.addf %110, %109 : vector<8x128xf32>
    %112 = arith.divf %110, %111 : vector<8x128xf32>
    %113 = arith.mulf %104, %86 : vector<8x128xf32>
    %114 = arith.mulf %98, %106 : vector<8x128xf32>
    %115 = arith.addf %113, %114 : vector<8x128xf32>
    %116 = math.tanh %115 : vector<8x128xf32>
    %117 = arith.mulf %112, %116 : vector<8x128xf32>
    %c32 = arith.constant 32 : index
    %c0_29 = arith.constant 0 : index
    %118 = vector.load %arg0[%c32, %c0_29] : memref<64x512xf32, #tpu.memory_space<vmem>>, vector<8x512xf32>
    %c0_30 = arith.constant 0 : index
    %c0_31 = arith.constant 0 : index
    %119 = vector.load %arg1[%c0_30, %c0_31] : memref<128x512xf32, #tpu.memory_space<vmem>>, vector<128x512xf32>
    %cst_32 = arith.constant dense<0.000000e+00> : vector<8x512xf32>
    %120 = tpu.matmul %117, %119, %cst_32 {dimension_numbers = #tpu.dot_dimension_numbers<[1], [0], [0], [1], [0, 0, 1, 1], [], []>} : vector<8x128xf32>, vector<128x512xf32>, vector<8x512xf32> -> vector<8x512xf32>
    %121 = arith.addf %118, %120 : vector<8x512xf32>
    %122 = vector.extract_strided_slice %121 {offsets = [0, 0], sizes = [8, 128], strides = [1, 1]} : vector<8x512xf32> to vector<8x128xf32>
    %123 = arith.negf %122 : vector<8x128xf32>
    %124 = math.exp %123 : vector<8x128xf32>
    %cst_33 = arith.constant 1.000000e+00 : f32
    %125 = vector.broadcast %cst_33 : f32 to vector<8x128xf32>
    %126 = arith.addf %125, %124 : vector<8x128xf32>
    %127 = arith.divf %125, %126 : vector<8x128xf32>
    %128 = vector.extract_strided_slice %121 {offsets = [0, 128], sizes = [8, 128], strides = [1, 1]} : vector<8x512xf32> to vector<8x128xf32>
    %129 = arith.negf %128 : vector<8x128xf32>
    %130 = math.exp %129 : vector<8x128xf32>
    %cst_34 = arith.constant 1.000000e+00 : f32
    %131 = vector.broadcast %cst_34 : f32 to vector<8x128xf32>
    %132 = arith.addf %131, %130 : vector<8x128xf32>
    %133 = arith.divf %131, %132 : vector<8x128xf32>
    %134 = vector.extract_strided_slice %121 {offsets = [0, 256], sizes = [8, 128], strides = [1, 1]} : vector<8x512xf32> to vector<8x128xf32>
    %135 = math.tanh %134 : vector<8x128xf32>
    %136 = vector.extract_strided_slice %121 {offsets = [0, 384], sizes = [8, 128], strides = [1, 1]} : vector<8x512xf32> to vector<8x128xf32>
    %137 = arith.negf %136 : vector<8x128xf32>
    %138 = math.exp %137 : vector<8x128xf32>
    %cst_35 = arith.constant 1.000000e+00 : f32
    %139 = vector.broadcast %cst_35 : f32 to vector<8x128xf32>
    %140 = arith.addf %139, %138 : vector<8x128xf32>
    %141 = arith.divf %139, %140 : vector<8x128xf32>
    %142 = arith.mulf %133, %115 : vector<8x128xf32>
    %143 = arith.mulf %127, %135 : vector<8x128xf32>
    %144 = arith.addf %142, %143 : vector<8x128xf32>
    %145 = math.tanh %144 : vector<8x128xf32>
    %146 = arith.mulf %141, %145 : vector<8x128xf32>
    %c40 = arith.constant 40 : index
    %c0_36 = arith.constant 0 : index
    %147 = vector.load %arg0[%c40, %c0_36] : memref<64x512xf32, #tpu.memory_space<vmem>>, vector<8x512xf32>
    %c0_37 = arith.constant 0 : index
    %c0_38 = arith.constant 0 : index
    %148 = vector.load %arg1[%c0_37, %c0_38] : memref<128x512xf32, #tpu.memory_space<vmem>>, vector<128x512xf32>
    %cst_39 = arith.constant dense<0.000000e+00> : vector<8x512xf32>
    %149 = tpu.matmul %146, %148, %cst_39 {dimension_numbers = #tpu.dot_dimension_numbers<[1], [0], [0], [1], [0, 0, 1, 1], [], []>} : vector<8x128xf32>, vector<128x512xf32>, vector<8x512xf32> -> vector<8x512xf32>
    %150 = arith.addf %147, %149 : vector<8x512xf32>
    %151 = vector.extract_strided_slice %150 {offsets = [0, 0], sizes = [8, 128], strides = [1, 1]} : vector<8x512xf32> to vector<8x128xf32>
    %152 = arith.negf %151 : vector<8x128xf32>
    %153 = math.exp %152 : vector<8x128xf32>
    %cst_40 = arith.constant 1.000000e+00 : f32
    %154 = vector.broadcast %cst_40 : f32 to vector<8x128xf32>
    %155 = arith.addf %154, %153 : vector<8x128xf32>
    %156 = arith.divf %154, %155 : vector<8x128xf32>
    %157 = vector.extract_strided_slice %150 {offsets = [0, 128], sizes = [8, 128], strides = [1, 1]} : vector<8x512xf32> to vector<8x128xf32>
    %158 = arith.negf %157 : vector<8x128xf32>
    %159 = math.exp %158 : vector<8x128xf32>
    %cst_41 = arith.constant 1.000000e+00 : f32
    %160 = vector.broadcast %cst_41 : f32 to vector<8x128xf32>
    %161 = arith.addf %160, %159 : vector<8x128xf32>
    %162 = arith.divf %160, %161 : vector<8x128xf32>
    %163 = vector.extract_strided_slice %150 {offsets = [0, 256], sizes = [8, 128], strides = [1, 1]} : vector<8x512xf32> to vector<8x128xf32>
    %164 = math.tanh %163 : vector<8x128xf32>
    %165 = vector.extract_strided_slice %150 {offsets = [0, 384], sizes = [8, 128], strides = [1, 1]} : vector<8x512xf32> to vector<8x128xf32>
    %166 = arith.negf %165 : vector<8x128xf32>
    %167 = math.exp %166 : vector<8x128xf32>
    %cst_42 = arith.constant 1.000000e+00 : f32
    %168 = vector.broadcast %cst_42 : f32 to vector<8x128xf32>
    %169 = arith.addf %168, %167 : vector<8x128xf32>
    %170 = arith.divf %168, %169 : vector<8x128xf32>
    %171 = arith.mulf %162, %144 : vector<8x128xf32>
    %172 = arith.mulf %156, %164 : vector<8x128xf32>
    %173 = arith.addf %171, %172 : vector<8x128xf32>
    %174 = math.tanh %173 : vector<8x128xf32>
    %175 = arith.mulf %170, %174 : vector<8x128xf32>
    %c48 = arith.constant 48 : index
    %c0_43 = arith.constant 0 : index
    %176 = vector.load %arg0[%c48, %c0_43] : memref<64x512xf32, #tpu.memory_space<vmem>>, vector<8x512xf32>
    %c0_44 = arith.constant 0 : index
    %c0_45 = arith.constant 0 : index
    %177 = vector.load %arg1[%c0_44, %c0_45] : memref<128x512xf32, #tpu.memory_space<vmem>>, vector<128x512xf32>
    %cst_46 = arith.constant dense<0.000000e+00> : vector<8x512xf32>
    %178 = tpu.matmul %175, %177, %cst_46 {dimension_numbers = #tpu.dot_dimension_numbers<[1], [0], [0], [1], [0, 0, 1, 1], [], []>} : vector<8x128xf32>, vector<128x512xf32>, vector<8x512xf32> -> vector<8x512xf32>
    %179 = arith.addf %176, %178 : vector<8x512xf32>
    %180 = vector.extract_strided_slice %179 {offsets = [0, 0], sizes = [8, 128], strides = [1, 1]} : vector<8x512xf32> to vector<8x128xf32>
    %181 = arith.negf %180 : vector<8x128xf32>
    %182 = math.exp %181 : vector<8x128xf32>
    %cst_47 = arith.constant 1.000000e+00 : f32
    %183 = vector.broadcast %cst_47 : f32 to vector<8x128xf32>
    %184 = arith.addf %183, %182 : vector<8x128xf32>
    %185 = arith.divf %183, %184 : vector<8x128xf32>
    %186 = vector.extract_strided_slice %179 {offsets = [0, 128], sizes = [8, 128], strides = [1, 1]} : vector<8x512xf32> to vector<8x128xf32>
    %187 = arith.negf %186 : vector<8x128xf32>
    %188 = math.exp %187 : vector<8x128xf32>
    %cst_48 = arith.constant 1.000000e+00 : f32
    %189 = vector.broadcast %cst_48 : f32 to vector<8x128xf32>
    %190 = arith.addf %189, %188 : vector<8x128xf32>
    %191 = arith.divf %189, %190 : vector<8x128xf32>
    %192 = vector.extract_strided_slice %179 {offsets = [0, 256], sizes = [8, 128], strides = [1, 1]} : vector<8x512xf32> to vector<8x128xf32>
    %193 = math.tanh %192 : vector<8x128xf32>
    %194 = vector.extract_strided_slice %179 {offsets = [0, 384], sizes = [8, 128], strides = [1, 1]} : vector<8x512xf32> to vector<8x128xf32>
    %195 = arith.negf %194 : vector<8x128xf32>
    %196 = math.exp %195 : vector<8x128xf32>
    %cst_49 = arith.constant 1.000000e+00 : f32
    %197 = vector.broadcast %cst_49 : f32 to vector<8x128xf32>
    %198 = arith.addf %197, %196 : vector<8x128xf32>
    %199 = arith.divf %197, %198 : vector<8x128xf32>
    %200 = arith.mulf %191, %173 : vector<8x128xf32>
    %201 = arith.mulf %185, %193 : vector<8x128xf32>
    %202 = arith.addf %200, %201 : vector<8x128xf32>
    %203 = math.tanh %202 : vector<8x128xf32>
    %204 = arith.mulf %199, %203 : vector<8x128xf32>
    %c56 = arith.constant 56 : index
    %c0_50 = arith.constant 0 : index
    %205 = vector.load %arg0[%c56, %c0_50] : memref<64x512xf32, #tpu.memory_space<vmem>>, vector<8x512xf32>
    %c0_51 = arith.constant 0 : index
    %c0_52 = arith.constant 0 : index
    %206 = vector.load %arg1[%c0_51, %c0_52] : memref<128x512xf32, #tpu.memory_space<vmem>>, vector<128x512xf32>
    %cst_53 = arith.constant dense<0.000000e+00> : vector<8x512xf32>
    %207 = tpu.matmul %204, %206, %cst_53 {dimension_numbers = #tpu.dot_dimension_numbers<[1], [0], [0], [1], [0, 0, 1, 1], [], []>} : vector<8x128xf32>, vector<128x512xf32>, vector<8x512xf32> -> vector<8x512xf32>
    %208 = arith.addf %205, %207 : vector<8x512xf32>
    %209 = vector.extract_strided_slice %208 {offsets = [0, 0], sizes = [8, 128], strides = [1, 1]} : vector<8x512xf32> to vector<8x128xf32>
    %210 = arith.negf %209 : vector<8x128xf32>
    %211 = math.exp %210 : vector<8x128xf32>
    %cst_54 = arith.constant 1.000000e+00 : f32
    %212 = vector.broadcast %cst_54 : f32 to vector<8x128xf32>
    %213 = arith.addf %212, %211 : vector<8x128xf32>
    %214 = arith.divf %212, %213 : vector<8x128xf32>
    %215 = vector.extract_strided_slice %208 {offsets = [0, 128], sizes = [8, 128], strides = [1, 1]} : vector<8x512xf32> to vector<8x128xf32>
    %216 = arith.negf %215 : vector<8x128xf32>
    %217 = math.exp %216 : vector<8x128xf32>
    %cst_55 = arith.constant 1.000000e+00 : f32
    %218 = vector.broadcast %cst_55 : f32 to vector<8x128xf32>
    %219 = arith.addf %218, %217 : vector<8x128xf32>
    %220 = arith.divf %218, %219 : vector<8x128xf32>
    %221 = vector.extract_strided_slice %208 {offsets = [0, 256], sizes = [8, 128], strides = [1, 1]} : vector<8x512xf32> to vector<8x128xf32>
    %222 = math.tanh %221 : vector<8x128xf32>
    %223 = vector.extract_strided_slice %208 {offsets = [0, 384], sizes = [8, 128], strides = [1, 1]} : vector<8x512xf32> to vector<8x128xf32>
    %224 = arith.negf %223 : vector<8x128xf32>
    %225 = math.exp %224 : vector<8x128xf32>
    %cst_56 = arith.constant 1.000000e+00 : f32
    %226 = vector.broadcast %cst_56 : f32 to vector<8x128xf32>
    %227 = arith.addf %226, %225 : vector<8x128xf32>
    %228 = arith.divf %226, %227 : vector<8x128xf32>
    %229 = arith.mulf %220, %202 : vector<8x128xf32>
    %230 = arith.mulf %214, %222 : vector<8x128xf32>
    %231 = arith.addf %229, %230 : vector<8x128xf32>
    %232 = math.tanh %231 : vector<8x128xf32>
    %233 = arith.mulf %228, %232 : vector<8x128xf32>
    %c0_57 = arith.constant 0 : index
    %c0_58 = arith.constant 0 : index
    %234 = vector.load %arg2[%c0_57, %c0_58] : memref<128x16xf32, #tpu.memory_space<vmem>>, vector<128x16xf32>
    %cst_59 = arith.constant dense<0.000000e+00> : vector<8x16xf32>
    %235 = tpu.matmul %233, %234, %cst_59 {dimension_numbers = #tpu.dot_dimension_numbers<[1], [0], [0], [1], [0, 0, 1, 1], [], []>} : vector<8x128xf32>, vector<128x16xf32>, vector<8x16xf32> -> vector<8x16xf32>
    %c0_60 = arith.constant 0 : index
    %c0_61 = arith.constant 0 : index
    %236 = vector.load %arg3[%c0_60, %c0_61] : memref<1x16xf32, #tpu.memory_space<vmem>>, vector<1x16xf32>
    %237 = vector.broadcast %236 : vector<1x16xf32> to vector<8x16xf32>
    %238 = arith.addf %235, %237 : vector<8x16xf32>
    %c0_62 = arith.constant 0 : index
    %c0_63 = arith.constant 0 : index
    %239 = vector.load %arg4[%c0_62, %c0_63] : memref<8x16xf32, #tpu.memory_space<vmem>>, vector<8x16xf32>
    tpu.vector_store %arg4[%c0_62, %c0_63], %238 {strides = array<i32>} : memref<8x16xf32, #tpu.memory_space<vmem>>, vector<8x16xf32>,
    return
  }
}

</mosaic_0001>

<llo_original>
// kernel: lstm_encoder_forward.1
$region0: #{lstm_encoder_forward.1}
  #allocation0 [shape = 'u32[]', space=smem, size = 0x4, offset = 0x4, fixed_abs, tag = 'smem constant byte address 0x4 - core index']
  #allocation1 [shape = 'u32[144,128]{1,0:T(1,128)}', space=vmem, size = 0x12000, scoped, tag = 'internal scratch']
  %s0 = inlined_call_operand.vmem [shape: f32[64,512], index: 0, kind: input, shape index: {}]
  %s1 = inlined_call_operand.vmem [shape: f32[128,512], index: 1, kind: input, shape index: {}]
  %s2 = inlined_call_operand.vmem [shape: f32[128,16], index: 2, kind: input, shape index: {}]
  %s3 = inlined_call_operand.vmem [shape: f32[1,16], index: 3, kind: input, shape index: {}]
  %s4 = inlined_call_operand.hbm [shape: f32[8,16], index: 4, kind: output, shape index: {}]
  %s5 = sld [smem:[#allocation0]]
  $region26: #{lstm_encoder_forward.1} parent=0
    _
  %s7 = ssub.s32 1, %s5
  %s8 = scalar_select 0, %s7, %s5
  $region1: #{lstm_encoder_forward.1} parent=0
    #allocation2 [shape = 'u8[4096]{0}', space=vmem, size = 0x1000, scoped, tag = 'output window, operand 0, single buffered']
    #allocation3 [shape = 's32[1]{0}', space=sflag, size = 0x4, scoped, tag = 'scoped memory for lstm_encoder_forward.1']
    %9 = vsyncpa [#allocation3], 0
    // Predicated region
    $region2: #{lstm_encoder_forward.1} parent=1 // pred_check
      _
    $region3: #{lstm_encoder_forward.1} parent=1 // pred_check_branch
      %11 = sbr.rel (0) target = $region5
    $region4: #{lstm_encoder_forward.1} parent=1 // pred_region
      _
    $region5: #{lstm_encoder_forward.1} parent=1 // pred_fallthru
      _
    // Predicated region
    $region6: #{lstm_encoder_forward.1} parent=1 // pred_check
      _
    $region7: #{lstm_encoder_forward.1} parent=1 // pred_check_branch
      %13 = sbr.rel (0) target = $region9
    $region8: #{lstm_encoder_forward.1} parent=1 // pred_region
      _
    $region9: #{lstm_encoder_forward.1} parent=1 // pred_fallthru
      _
    // Predicated region
    $region10: #{lstm_encoder_forward.1} parent=1 // pred_check
      _
    $region11: #{lstm_encoder_forward.1} parent=1 // pred_check_branch
      %15 = sbr.rel (0) target = $region13
    $region12: #{lstm_encoder_forward.1} parent=1 // pred_region
      _
    $region13: #{lstm_encoder_forward.1} parent=1 // pred_fallthru
      _
    // Predicated region
    $region14: #{lstm_encoder_forward.1} parent=1 // pred_check
      _
    $region15: #{lstm_encoder_forward.1} parent=1 // pred_check_branch
      %17 = sbr.rel (0) target = $region17
    $region16: #{lstm_encoder_forward.1} parent=1 // pred_region
      _
    $region17: #{lstm_encoder_forward.1} parent=1 // pred_fallthru
      _
    %v18 = vld [vmem:[%s0] sm:$0xff]
    %v19 = vld [vmem:[%s0 + $0x8] sm:$0xff]
    %v20 = vld [vmem:[%s0 + $0x10] sm:$0xff]
    %v21 = vld [vmem:[%s0 + $0x18] sm:$0xff]
    %v22 = vld [vmem:[%s1] sm:$0xff]
    %v23 = vld [vmem:[%s1 + $0x8] sm:$0xff]
    %v24 = vld [vmem:[%s1 + $0x10] sm:$0xff]
    %v25 = vld [vmem:[%s1 + $0x18] sm:$0xff]
    %v26 = vld [vmem:[%s1 + $0x20] sm:$0xff]
    %v27 = vld [vmem:[%s1 + $0x28] sm:$0xff]
    %v28 = vld [vmem:[%s1 + $0x30] sm:$0xff]
    %v29 = vld [vmem:[%s1 + $0x38] sm:$0xff]
    %v30 = vld [vmem:[%s1 + $0x40] sm:$0xff]
    %v31 = vld [vmem:[%s1 + $0x48] sm:$0xff]
    %v32 = vld [vmem:[%s1 + $0x50] sm:$0xff]
    %v33 = vld [vmem:[%s1 + $0x58] sm:$0xff]
    %v34 = vld [vmem:[%s1 + $0x60] sm:$0xff]
    %v35 = vld [vmem:[%s1 + $0x68] sm:$0xff]
    %v36 = vld [vmem:[%s1 + $0x70] sm:$0xff]
    %v37 = vld [vmem:[%s1 + $0x78] sm:$0xff]
    %v38 = vld [vmem:[%s1 + $0x80] sm:$0xff]
    %v39 = vld [vmem:[%s1 + $0x88] sm:$0xff]
    %v40 = vld [vmem:[%s1 + $0x90] sm:$0xff]
    %v41 = vld [vmem:[%s1 + $0x98] sm:$0xff]
    %v42 = vld [vmem:[%s1 + $0xa0] sm:$0xff]
    %v43 = vld [vmem:[%s1 + $0xa8] sm:$0xff]
    %v44 = vld [vmem:[%s1 + $0xb0] sm:$0xff]
    %v45 = vld [vmem:[%s1 + $0xb8] sm:$0xff]
    %v46 = vld [vmem:[%s1 + $0xc0] sm:$0xff]
    %v47 = vld [vmem:[%s1 + $0xc8] sm:$0xff]
    %v48 = vld [vmem:[%s1 + $0xd0] sm:$0xff]
    %v49 = vld [vmem:[%s1 + $0xd8] sm:$0xff]
    %v50 = vld [vmem:[%s1 + $0xe0] sm:$0xff]
    %v51 = vld [vmem:[%s1 + $0xe8] sm:$0xff]
    %v52 = vld [vmem:[%s1 + $0xf0] sm:$0xff]
    %v53 = vld [vmem:[%s1 + $0xf8] sm:$0xff]
    %v54 = vld [vmem:[%s1 + $0x100] sm:$0xff]
    %v55 = vld [vmem:[%s1 + $0x108] sm:$0xff]
    %v56 = vld [vmem:[%s1 + $0x110] sm:$0xff]
    %v57 = vld [vmem:[%s1 + $0x118] sm:$0xff]
    %v58 = vld [vmem:[%s1 + $0x120] sm:$0xff]
    %v59 = vld [vmem:[%s1 + $0x128] sm:$0xff]
    %v60 = vld [vmem:[%s1 + $0x130] sm:$0xff]
    %v61 = vld [vmem:[%s1 + $0x138] sm:$0xff]
    %v62 = vld [vmem:[%s1 + $0x140] sm:$0xff]
    %v63 = vld [vmem:[%s1 + $0x148] sm:$0xff]
    %v64 = vld [vmem:[%s1 + $0x150] sm:$0xff]
    %v65 = vld [vmem:[%s1 + $0x158] sm:$0xff]
    %v66 = vld [vmem:[%s1 + $0x160] sm:$0xff]
    %v67 = vld [vmem:[%s1 + $0x168] sm:$0xff]
    %v68 = vld [vmem:[%s1 + $0x170] sm:$0xff]
    %v69 = vld [vmem:[%s1 + $0x178] sm:$0xff]
    %v70 = vld [vmem:[%s1 + $0x180] sm:$0xff]
    %v71 = vld [vmem:[%s1 + $0x188] sm:$0xff]
    %v72 = vld [vmem:[%s1 + $0x190] sm:$0xff]
    %v73 = vld [vmem:[%s1 + $0x198] sm:$0xff]
    %v74 = vld [vmem:[%s1 + $0x1a0] sm:$0xff]
    %v75 = vld [vmem:[%s1 + $0x1a8] sm:$0xff]
    %v76 = vld [vmem:[%s1 + $0x1b0] sm:$0xff]
    %v77 = vld [vmem:[%s1 + $0x1b8] sm:$0xff]
    %v78 = vld [vmem:[%s1 + $0x1c0] sm:$0xff]
    %v79 = vld [vmem:[%s1 + $0x1c8] sm:$0xff]
    %v80 = vld [vmem:[%s1 + $0x1d0] sm:$0xff]
    %v81 = vld [vmem:[%s1 + $0x1d8] sm:$0xff]
    %v82 = vld [vmem:[%s1 + $0x1e0] sm:$0xff]
    %v83 = vld [vmem:[%s1 + $0x1e8] sm:$0xff]
    %v84 = vld [vmem:[%s1 + $0x1f0] sm:$0xff]
    %v85 = vld [vmem:[%s1 + $0x1f8] sm:$0xff]
    %86 = vmatprep.subr.mxu0 %v83
    %87 = vmatpush1.msra.mxu0 %v82
    %88 = vmatprep.subr.mxu0 %v79
    %89 = vmatpush1.msra.mxu0 %v78
    %90 = vmatprep.subr.mxu0 %v75
    %91 = vmatpush1.msra.mxu0 %v74
    %92 = vmatprep.subr.mxu0 %v71
    %93 = vmatpush1.msra.mxu0 %v70
    %94 = vmatprep.subr.mxu0 %v67
    %95 = vmatpush1.msra.mxu0 %v66
    %96 = vmatprep.subr.mxu0 %v63
    %97 = vmatpush1.msra.mxu0 %v62
    %98 = vmatprep.subr.mxu0 %v59
    %99 = vmatpush1.msra.mxu0 %v58
    %100 = vmatprep.subr.mxu0 %v55
    %101 = vmatpush1.msra.mxu0 %v54
    %102 = vmatprep.subr.mxu0 %v51
    %103 = vmatpush1.msra.mxu0 %v50
    %104 = vmatprep.subr.mxu0 %v47
    %105 = vmatpush1.msra.mxu0 %v46
    %106 = vmatprep.subr.mxu0 %v43
    %107 = vmatpush1.msra.mxu0 %v42
    %108 = vmatprep.subr.mxu0 %v39
    %109 = vmatpush1.msra.mxu0 %v38
    %110 = vmatprep.subr.mxu0 %v35
    %111 = vmatpush1.msra.mxu0 %v34
    %112 = vmatprep.subr.mxu0 %v31
    %113 = vmatpush1.msra.mxu0 %v30
    %114 = vmatprep.subr.mxu0 %v27
    %115 = vmatpush1.msra.mxu0 %v26
    %116 = vmatprep.subr.mxu0 %v23
    %117 = vmatpush1.msra.mxu0 %v22
    %118 = vmatprep.subr.mxu0 0.0
    %119 = vmatpush2.msra.mxu0 0.0
    %120 = vmatprep.subr.mxu0 0.0
    %121 = vmatpush2.msra.mxu0 0.0
    %122 = vmatprep.subr.mxu0 0.0
    %123 = vmatpush2.msra.mxu0 0.0
    %124 = vmatprep.subr.mxu0 0.0
    %125 = vmatpush2.msra.mxu0 0.0
    %126 = vmatprep.subr.mxu0 0.0
    %127 = vmatpush2.msra.mxu0 0.0
    %128 = vmatprep.subr.mxu0 0.0
    %129 = vmatpush2.msra.mxu0 0.0
    %130 = vmatprep.subr.mxu0 0.0
    %131 = vmatpush2.msra.mxu0 0.0
    %132 = vmatprep.subr.mxu0 0.0
    %133 = vmatpush2.msra.mxu0 0.0
    %134 = vmatprep.subr.mxu0 0.0
    %135 = vmatpush2.msra.mxu0 0.0
    %136 = vmatprep.subr.mxu0 0.0
    %137 = vmatpush2.msra.mxu0 0.0
    %138 = vmatprep.subr.mxu0 0.0
    %139 = vmatpush2.msra.mxu0 0.0
    %140 = vmatprep.subr.mxu0 0.0
    %141 = vmatpush2.msra.mxu0 0.0
    %142 = vmatprep.subr.mxu0 0.0
    %143 = vmatpush2.msra.mxu0 0.0
    %144 = vmatprep.subr.mxu0 0.0
    %145 = vmatpush2.msra.mxu0 0.0
    %146 = vmatprep.subr.mxu0 0.0
    %147 = vmatpush2.msra.mxu0 0.0
    %148 = vmatprep.subr.mxu0 0.0
    %149 = vmatpush2.msra.mxu0 0.0
    %150 = vmatprep.mubr.f32.mxu0 0.0
    %151 = vmatmul.mubr.f32.gmra.mxu0 0.0
    %v152 = vpop.f32.mrf.mxu0
    %v153 = vadd.f32 0.0, %v152
    %v154 = vpop.f32.mrf.mxu0
    %v155 = vadd.f32 0.0, %v154
    %156 = vdwg.mxu0
    %157 = vmatprep.subr.mxu0 %v85
    %158 = vmatpush1.msra.mxu0 %v84
    %159 = vmatprep.subr.mxu0 %v81
    %160 = vmatpush1.msra.mxu0 %v80
    %161 = vmatprep.subr.mxu0 %v77
    %162 = vmatpush1.msra.mxu0 %v76
    %163 = vmatprep.subr.mxu0 %v73
    %164 = vmatpush1.msra.mxu0 %v72
    %165 = vmatprep.subr.mxu0 %v69
    %166 = vmatpush1.msra.mxu0 %v68
    %167 = vmatprep.subr.mxu0 %v65
    %168 = vmatpush1.msra.mxu0 %v64
    %169 = vmatprep.subr.mxu0 %v61
    %170 = vmatpush1.msra.mxu0 %v60
    %171 = vmatprep.subr.mxu0 %v57
    %172 = vmatpush1.msra.mxu0 %v56
    %173 = vmatprep.subr.mxu0 %v53
    %174 = vmatpush1.msra.mxu0 %v52
    %175 = vmatprep.subr.mxu0 %v49
    %176 = vmatpush1.msra.mxu0 %v48
    %177 = vmatprep.subr.mxu0 %v45
    %178 = vmatpush1.msra.mxu0 %v44
    %179 = vmatprep.subr.mxu0 %v41
    %180 = vmatpush1.msra.mxu0 %v40
    %181 = vmatprep.subr.mxu0 %v37
    %182 = vmatpush1.msra.mxu0 %v36
    %183 = vmatprep.subr.mxu0 %v33
    %184 = vmatpush1.msra.mxu0 %v32
    %185 = vmatprep.subr.mxu0 %v29
    %186 = vmatpush1.msra.mxu0 %v28
    %187 = vmatprep.subr.mxu0 %v25
    %188 = vmatpush1.msra.mxu0 %v24
    %189 = vmatprep.subr.mxu0 0.0
    %190 = vmatpush2.msra.mxu0 0.0
    %191 = vmatprep.subr.mxu0 0.0
    %192 = vmatpush2.msra.mxu0 0.0
    %193 = vmatprep.subr.mxu0 0.0
    %194 = vmatpush2.msra.mxu0 0.0
    %195 = vmatprep.subr.mxu0 0.0
    %196 = vmatpush2.msra.mxu0 0.0
    %197 = vmatprep.subr.mxu0 0.0
    %198 = vmatpush2.msra.mxu0 0.0
    %199 = vmatprep.subr.mxu0 0.0
    %200 = vmatpush2.msra.mxu0 0.0
    %201 = vmatprep.subr.mxu0 0.0
    %202 = vmatpush2.msra.mxu0 0.0
    %203 = vmatprep.subr.mxu0 0.0
    %204 = vmatpush2.msra.mxu0 0.0
    %205 = vmatprep.subr.mxu0 0.0
    %206 = vmatpush2.msra.mxu0 0.0
    %207 = vmatprep.subr.mxu0 0.0
    %208 = vmatpush2.msra.mxu0 0.0
    %209 = vmatprep.subr.mxu0 0.0
    %210 = vmatpush2.msra.mxu0 0.0
    %211 = vmatprep.subr.mxu0 0.0
    %212 = vmatpush2.msra.mxu0 0.0
    %213 = vmatprep.subr.mxu0 0.0
    %214 = vmatpush2.msra.mxu0 0.0
    %215 = vmatprep.subr.mxu0 0.0
    %216 = vmatpush2.msra.mxu0 0.0
    %217 = vmatprep.subr.mxu0 0.0
    %218 = vmatpush2.msra.mxu0 0.0
    %219 = vmatprep.subr.mxu0 0.0
    %220 = vmatpush2.msra.mxu0 0.0
    %221 = vmatprep.mubr.f32.mxu0 0.0
    %222 = vmatmul.mubr.f32.gmra.mxu0 0.0
    %v223 = vpop.f32.mrf.mxu0
    %v224 = vadd.f32 0.0, %v223
    %v225 = vpop.f32.mrf.mxu0
    %v226 = vadd.f32 0.0, %v225
    %227 = vdwg.mxu0
    %v228 = vadd.f32 %v18, %v153
    %v229 = vadd.f32 %v19, %v155
    %v230 = vadd.f32 %v20, %v224
    %v231 = vadd.f32 %v21, %v226
    %v232 = vxor.u32 %v228, 2147483648
    %v233 = vmul.f32 %v232, 1.442695
    %v234 = vpow.pop %v233
    %v235 = vadd.f32 %v234, 1.0
    %v236 = vrcp.pop %v235
    %v237 = vmul.f32 1.0, %v236
    %v238 = vxor.u32 %v229, 2147483648
    %v239 = vmul.f32 %v238, 1.442695
    %v240 = vpow.pop %v239
    %v241 = vadd.f32 %v240, 1.0
    %v242 = vrcp.pop %v241
    %v243 = vmul.f32 1.0, %v242
    %v244 = vtanh.pop %v230
    %v245 = vxor.u32 %v231, 2147483648
    %v246 = vmul.f32 %v245, 1.442695
    %v247 = vpow.pop %v246
    %v248 = vadd.f32 %v247, 1.0
    %v249 = vrcp.pop %v248
    %v250 = vmul.f32 1.0, %v249
    %v251 = vmul.f32 %v243, 0.0
    %v252 = vmul.f32 %v237, %v244
    %v253 = vadd.f32 %v251, %v252
    %v254 = vtanh.pop %v253
    %v255 = vmul.f32 %v250, %v254
    %v256 = vld [vmem:[%s0 + $0x20] sm:$0xff]
    %v257 = vld [vmem:[%s0 + $0x28] sm:$0xff]
    %v258 = vld [vmem:[%s0 + $0x30] sm:$0xff]
    %v259 = vld [vmem:[%s0 + $0x38] sm:$0xff]
    %260 = vmatprep.subr.mxu0 %v83
    %261 = vmatpush1.msra.mxu0 %v82
    %262 = vmatprep.subr.mxu0 %v79
    %263 = vmatpush1.msra.mxu0 %v78
    %264 = vmatprep.subr.mxu0 %v75
    %265 = vmatpush1.msra.mxu0 %v74
    %266 = vmatprep.subr.mxu0 %v71
    %267 = vmatpush1.msra.mxu0 %v70
    %268 = vmatprep.subr.mxu0 %v67
    %269 = vmatpush1.msra.mxu0 %v66
    %270 = vmatprep.subr.mxu0 %v63
    %271 = vmatpush1.msra.mxu0 %v62
    %272 = vmatprep.subr.mxu0 %v59
    %273 = vmatpush1.msra.mxu0 %v58
    %274 = vmatprep.subr.mxu0 %v55
    %275 = vmatpush1.msra.mxu0 %v54
    %276 = vmatprep.subr.mxu0 %v51
    %277 = vmatpush1.msra.mxu0 %v50
    %278 = vmatprep.subr.mxu0 %v47
    %279 = vmatpush1.msra.mxu0 %v46
    %280 = vmatprep.subr.mxu0 %v43
    %281 = vmatpush1.msra.mxu0 %v42
    %282 = vmatprep.subr.mxu0 %v39
    %283 = vmatpush1.msra.mxu0 %v38
    %284 = vmatprep.subr.mxu0 %v35
    %285 = vmatpush1.msra.mxu0 %v34
    %286 = vmatprep.subr.mxu0 %v31
    %287 = vmatpush1.msra.mxu0 %v30
    %288 = vmatprep.subr.mxu0 %v27
    %289 = vmatpush1.msra.mxu0 %v26
    %290 = vmatprep.subr.mxu0 %v23
    %291 = vmatpush1.msra.mxu0 %v22
    %292 = vmatprep.subr.mxu0 0.0
    %293 = vmatpush2.msra.mxu0 0.0
    %294 = vmatprep.subr.mxu0 0.0
    %295 = vmatpush2.msra.mxu0 0.0
    %296 = vmatprep.subr.mxu0 0.0
    %297 = vmatpush2.msra.mxu0 0.0
    %298 = vmatprep.subr.mxu0 0.0
    %299 = vmatpush2.msra.mxu0 0.0
    %300 = vmatprep.subr.mxu0 0.0
    %301 = vmatpush2.msra.mxu0 0.0
    %302 = vmatprep.subr.mxu0 0.0
    %303 = vmatpush2.msra.mxu0 0.0
    %304 = vmatprep.subr.mxu0 0.0
    %305 = vmatpush2.msra.mxu0 0.0
    %306 = vmatprep.subr.mxu0 0.0
    %307 = vmatpush2.msra.mxu0 0.0
    %308 = vmatprep.subr.mxu0 0.0
    %309 = vmatpush2.msra.mxu0 0.0
    %310 = vmatprep.subr.mxu0 0.0
    %311 = vmatpush2.msra.mxu0 0.0
    %312 = vmatprep.subr.mxu0 0.0
    %313 = vmatpush2.msra.mxu0 0.0
    %314 = vmatprep.subr.mxu0 0.0
    %315 = vmatpush2.msra.mxu0 0.0
    %316 = vmatprep.subr.mxu0 0.0
    %317 = vmatpush2.msra.mxu0 0.0
    %318 = vmatprep.subr.mxu0 0.0
    %319 = vmatpush2.msra.mxu0 0.0
    %320 = vmatprep.subr.mxu0 0.0
    %321 = vmatpush2.msra.mxu0 0.0
    %322 = vmatprep.subr.mxu0 0.0
    %323 = vmatpush2.msra.mxu0 0.0
    %324 = vmatprep.mubr.f32.mxu0 0.0
    %325 = vmatmul.mubr.f32.gmra.mxu0 %v255
    %v326 = vpop.f32.mrf.mxu0
    %v327 = vadd.f32 0.0, %v326
    %v328 = vpop.f32.mrf.mxu0
    %v329 = vadd.f32 0.0, %v328
    %330 = vdwg.mxu0
    %331 = vmatprep.subr.mxu0 %v85
    %332 = vmatpush1.msra.mxu0 %v84
    %333 = vmatprep.subr.mxu0 %v81
    %334 = vmatpush1.msra.mxu0 %v80
    %335 = vmatprep.subr.mxu0 %v77
    %336 = vmatpush1.msra.mxu0 %v76
    %337 = vmatprep.subr.mxu0 %v73
    %338 = vmatpush1.msra.mxu0 %v72
    %339 = vmatprep.subr.mxu0 %v69
    %340 = vmatpush1.msra.mxu0 %v68
    %341 = vmatprep.subr.mxu0 %v65
    %342 = vmatpush1.msra.mxu0 %v64
    %343 = vmatprep.subr.mxu0 %v61
    %344 = vmatpush1.msra.mxu0 %v60
    %345 = vmatprep.subr.mxu0 %v57
    %346 = vmatpush1.msra.mxu0 %v56
    %347 = vmatprep.subr.mxu0 %v53
    %348 = vmatpush1.msra.mxu0 %v52
    %349 = vmatprep.subr.mxu0 %v49
    %350 = vmatpush1.msra.mxu0 %v48
    %351 = vmatprep.subr.mxu0 %v45
    %352 = vmatpush1.msra.mxu0 %v44
    %353 = vmatprep.subr.mxu0 %v41
    %354 = vmatpush1.msra.mxu0 %v40
    %355 = vmatprep.subr.mxu0 %v37
    %356 = vmatpush1.msra.mxu0 %v36
    %357 = vmatprep.subr.mxu0 %v33
    %358 = vmatpush1.msra.mxu0 %v32
    %359 = vmatprep.subr.mxu0 %v29
    %360 = vmatpush1.msra.mxu0 %v28
    %361 = vmatprep.subr.mxu0 %v25
    %362 = vmatpush1.msra.mxu0 %v24
    %363 = vmatprep.subr.mxu0 0.0
    %364 = vmatpush2.msra.mxu0 0.0
    %365 = vmatprep.subr.mxu0 0.0
    %366 = vmatpush2.msra.mxu0 0.0
    %367 = vmatprep.subr.mxu0 0.0
    %368 = vmatpush2.msra.mxu0 0.0
    %369 = vmatprep.subr.mxu0 0.0
    %370 = vmatpush2.msra.mxu0 0.0
    %371 = vmatprep.subr.mxu0 0.0
    %372 = vmatpush2.msra.mxu0 0.0
    %373 = vmatprep.subr.mxu0 0.0
    %374 = vmatpush2.msra.mxu0 0.0
    %375 = vmatprep.subr.mxu0 0.0
    %376 = vmatpush2.msra.mxu0 0.0
    %377 = vmatprep.subr.mxu0 0.0
    %378 = vmatpush2.msra.mxu0 0.0
    %379 = vmatprep.subr.mxu0 0.0
    %380 = vmatpush2.msra.mxu0 0.0
    %381 = vmatprep.subr.mxu0 0.0
    %382 = vmatpush2.msra.mxu0 0.0
    %383 = vmatprep.subr.mxu0 0.0
    %384 = vmatpush2.msra.mxu0 0.0
    %385 = vmatprep.subr.mxu0 0.0
    %386 = vmatpush2.msra.mxu0 0.0
    %387 = vmatprep.subr.mxu0 0.0
    %388 = vmatpush2.msra.mxu0 0.0
    %389 = vmatprep.subr.mxu0 0.0
    %390 = vmatpush2.msra.mxu0 0.0
    %391 = vmatprep.subr.mxu0 0.0
    %392 = vmatpush2.msra.mxu0 0.0
    %393 = vmatprep.subr.mxu0 0.0
    %394 = vmatpush2.msra.mxu0 0.0
    %395 = vmatprep.mubr.f32.mxu0 0.0
    %396 = vmatmul.mubr.f32.gmra.mxu0 %v255
    %v397 = vpop.f32.mrf.mxu0
    %v398 = vadd.f32 0.0, %v397
    %v399 = vpop.f32.mrf.mxu0
    %v400 = vadd.f32 0.0, %v399
    %401 = vdwg.mxu0
    %v402 = vadd.f32 %v256, %v327
    %v403 = vadd.f32 %v257, %v329
    %v404 = vadd.f32 %v258, %v398
    %v405 = vadd.f32 %v259, %v400
    %v406 = vxor.u32 %v402, 2147483648
    %v407 = vmul.f32 %v406, 1.442695
    %v408 = vpow.pop %v407
    %v409 = vadd.f32 %v408, 1.0
    %v410 = vrcp.pop %v409
    %v411 = vmul.f32 1.0, %v410
    %v412 = vxor.u32 %v403, 2147483648
    %v413 = vmul.f32 %v412, 1.442695
    %v414 = vpow.pop %v413
    %v415 = vadd.f32 %v414, 1.0
    %v416 = vrcp.pop %v415
    %v417 = vmul.f32 1.0, %v416
    %v418 = vtanh.pop %v404
    %v419 = vxor.u32 %v405, 2147483648
    %v420 = vmul.f32 %v419, 1.442695
    %v421 = vpow.pop %v420
    %v422 = vadd.f32 %v421, 1.0
    %v423 = vrcp.pop %v422
    %v424 = vmul.f32 1.0, %v423
    %v425 = vmul.f32 %v417, %v253
    %v426 = vmul.f32 %v411, %v418
    %v427 = vadd.f32 %v425, %v426
    %v428 = vtanh.pop %v427
    %v429 = vmul.f32 %v424, %v428
    %v430 = vld [vmem:[%s0 + $0x40] sm:$0xff]
    %v431 = vld [vmem:[%s0 + $0x48] sm:$0xff]
    %v432 = vld [vmem:[%s0 + $0x50] sm:$0xff]
    %v433 = vld [vmem:[%s0 + $0x58] sm:$0xff]
    %434 = vmatprep.subr.mxu0 %v83
    %435 = vmatpush1.msra.mxu0 %v82
    %436 = vmatprep.subr.mxu0 %v79
    %437 = vmatpush1.msra.mxu0 %v78
    %438 = vmatprep.subr.mxu0 %v75
    %439 = vmatpush1.msra.mxu0 %v74
    %440 = vmatprep.subr.mxu0 %v71
    %441 = vmatpush1.msra.mxu0 %v70
    %442 = vmatprep.subr.mxu0 %v67
    %443 = vmatpush1.msra.mxu0 %v66
    %444 = vmatprep.subr.mxu0 %v63
    %445 = vmatpush1.msra.mxu0 %v62
    %446 = vmatprep.subr.mxu0 %v59
    %447 = vmatpush1.msra.mxu0 %v58
    %448 = vmatprep.subr.mxu0 %v55
    %449 = vmatpush1.msra.mxu0 %v54
    %450 = vmatprep.subr.mxu0 %v51
    %451 = vmatpush1.msra.mxu0 %v50
    %452 = vmatprep.subr.mxu0 %v47
    %453 = vmatpush1.msra.mxu0 %v46
    %454 = vmatprep.subr.mxu0 %v43
    %455 = vmatpush1.msra.mxu0 %v42
    %456 = vmatprep.subr.mxu0 %v39
    %457 = vmatpush1.msra.mxu0 %v38
    %458 = vmatprep.subr.mxu0 %v35
    %459 = vmatpush1.msra.mxu0 %v34
    %460 = vmatprep.subr.mxu0 %v31
    %461 = vmatpush1.msra.mxu0 %v30
    %462 = vmatprep.subr.mxu0 %v27
    %463 = vmatpush1.msra.mxu0 %v26
    %464 = vmatprep.subr.mxu0 %v23
    %465 = vmatpush1.msra.mxu0 %v22
    %466 = vmatprep.subr.mxu0 0.0
    %467 = vmatpush2.msra.mxu0 0.0
    %468 = vmatprep.subr.mxu0 0.0
    %469 = vmatpush2.msra.mxu0 0.0
    %470 = vmatprep.subr.mxu0 0.0
    %471 = vmatpush2.msra.mxu0 0.0
    %472 = vmatprep.subr.mxu0 0.0
    %473 = vmatpush2.msra.mxu0 0.0
    %474 = vmatprep.subr.mxu0 0.0
    %475 = vmatpush2.msra.mxu0 0.0
    %476 = vmatprep.subr.mxu0 0.0
    %477 = vmatpush2.msra.mxu0 0.0
    %478 = vmatprep.subr.mxu0 0.0
    %479 = vmatpush2.msra.mxu0 0.0
    %480 = vmatprep.subr.mxu0 0.0
    %481 = vmatpush2.msra.mxu0 0.0
    %482 = vmatprep.subr.mxu0 0.0
    %483 = vmatpush2.msra.mxu0 0.0
    %484 = vmatprep.subr.mxu0 0.0
    %485 = vmatpush2.msra.mxu0 0.0
    %486 = vmatprep.subr.mxu0 0.0
    %487 = vmatpush2.msra.mxu0 0.0
    %488 = vmatprep.subr.mxu0 0.0
    %489 = vmatpush2.msra.mxu0 0.0
    %490 = vmatprep.subr.mxu0 0.0
    %491 = vmatpush2.msra.mxu0 0.0
    %492 = vmatprep.subr.mxu0 0.0
    %493 = vmatpush2.msra.mxu0 0.0
    %494 = vmatprep.subr.mxu0 0.0
    %495 = vmatpush2.msra.mxu0 0.0
    %496 = vmatprep.subr.mxu0 0.0
    %497 = vmatpush2.msra.mxu0 0.0
    %498 = vmatprep.mubr.f32.mxu0 0.0
    %499 = vmatmul.mubr.f32.gmra.mxu0 %v429
    %v500 = vpop.f32.mrf.mxu0
    %v501 = vadd.f32 0.0, %v500
    %v502 = vpop.f32.mrf.mxu0
    %v503 = vadd.f32 0.0, %v502
    %504 = vdwg.mxu0
    %505 = vmatprep.subr.mxu0 %v85
    %506 = vmatpush1.msra.mxu0 %v84
    %507 = vmatprep.subr.mxu0 %v81
    %508 = vmatpush1.msra.mxu0 %v80
    %509 = vmatprep.subr.mxu0 %v77
    %510 = vmatpush1.msra.mxu0 %v76
    %511 = vmatprep.subr.mxu0 %v73
    %512 = vmatpush1.msra.mxu0 %v72
    %513 = vmatprep.subr.mxu0 %v69
    %514 = vmatpush1.msra.mxu0 %v68
    %515 = vmatprep.subr.mxu0 %v65
    %516 = vmatpush1.msra.mxu0 %v64
    %517 = vmatprep.subr.mxu0 %v61
    %518 = vmatpush1.msra.mxu0 %v60
    %519 = vmatprep.subr.mxu0 %v57
    %520 = vmatpush1.msra.mxu0 %v56
    %521 = vmatprep.subr.mxu0 %v53
    %522 = vmatpush1.msra.mxu0 %v52
    %523 = vmatprep.subr.mxu0 %v49
    %524 = vmatpush1.msra.mxu0 %v48
    %525 = vmatprep.subr.mxu0 %v45
    %526 = vmatpush1.msra.mxu0 %v44
    %527 = vmatprep.subr.mxu0 %v41
    %528 = vmatpush1.msra.mxu0 %v40
    %529 = vmatprep.subr.mxu0 %v37
    %530 = vmatpush1.msra.mxu0 %v36
    %531 = vmatprep.subr.mxu0 %v33
    %532 = vmatpush1.msra.mxu0 %v32
    %533 = vmatprep.subr.mxu0 %v29
    %534 = vmatpush1.msra.mxu0 %v28
    %535 = vmatprep.subr.mxu0 %v25
    %536 = vmatpush1.msra.mxu0 %v24
    %537 = vmatprep.subr.mxu0 0.0
    %538 = vmatpush2.msra.mxu0 0.0
    %539 = vmatprep.subr.mxu0 0.0
    %540 = vmatpush2.msra.mxu0 0.0
    %541 = vmatprep.subr.mxu0 0.0
    %542 = vmatpush2.msra.mxu0 0.0
    %543 = vmatprep.subr.mxu0 0.0
    %544 = vmatpush2.msra.mxu0 0.0
    %545 = vmatprep.subr.mxu0 0.0
    %546 = vmatpush2.msra.mxu0 0.0
    %547 = vmatprep.subr.mxu0 0.0
    %548 = vmatpush2.msra.mxu0 0.0
    %549 = vmatprep.subr.mxu0 0.0
    %550 = vmatpush2.msra.mxu0 0.0
    %551 = vmatprep.subr.mxu0 0.0
    %552 = vmatpush2.msra.mxu0 0.0
    %553 = vmatprep.subr.mxu0 0.0
    %554 = vmatpush2.msra.mxu0 0.0
    %555 = vmatprep.subr.mxu0 0.0
    %556 = vmatpush2.msra.mxu0 0.0
    %557 = vmatprep.subr.mxu0 0.0
    %558 = vmatpush2.msra.mxu0 0.0
    %559 = vmatprep.subr.mxu0 0.0
    %560 = vmatpush2.msra.mxu0 0.0
    %561 = vmatprep.subr.mxu0 0.0
    %562 = vmatpush2.msra.mxu0 0.0
    %563 = vmatprep.subr.mxu0 0.0
    %564 = vmatpush2.msra.mxu0 0.0
    %565 = vmatprep.subr.mxu0 0.0
    %566 = vmatpush2.msra.mxu0 0.0
    %567 = vmatprep.subr.mxu0 0.0
    %568 = vmatpush2.msra.mxu0 0.0
    %569 = vmatprep.mubr.f32.mxu0 0.0
    %570 = vmatmul.mubr.f32.gmra.mxu0 %v429
    %v571 = vpop.f32.mrf.mxu0
    %v572 = vadd.f32 0.0, %v571
    %v573 = vpop.f32.mrf.mxu0
    %v574 = vadd.f32 0.0, %v573
    %575 = vdwg.mxu0
    %v576 = vadd.f32 %v430, %v501
    %v577 = vadd.f32 %v431, %v503
    %v578 = vadd.f32 %v432, %v572
    %v579 = vadd.f32 %v433, %v574
    %v580 = vxor.u32 %v576, 2147483648
    %v581 = vmul.f32 %v580, 1.442695
    %v582 = vpow.pop %v581
    %v583 = vadd.f32 %v582, 1.0
    %v584 = vrcp.pop %v583
    %v585 = vmul.f32 1.0, %v584
    %v586 = vxor.u32 %v577, 2147483648
    %v587 = vmul.f32 %v586, 1.442695
    %v588 = vpow.pop %v587
    %v589 = vadd.f32 %v588, 1.0
    %v590 = vrcp.pop %v589
    %v591 = vmul.f32 1.0, %v590
    %v592 = vtanh.pop %v578
    %v593 = vxor.u32 %v579, 2147483648
    %v594 = vmul.f32 %v593, 1.442695
    %v595 = vpow.pop %v594
    %v596 = vadd.f32 %v595, 1.0
    %v597 = vrcp.pop %v596
    %v598 = vmul.f32 1.0, %v597
    %v599 = vmul.f32 %v591, %v427
    %v600 = vmul.f32 %v585, %v592
    %v601 = vadd.f32 %v599, %v600
    %v602 = vtanh.pop %v601
    %v603 = vmul.f32 %v598, %v602
    %v604 = vld [vmem:[%s0 + $0x60] sm:$0xff]
    %v605 = vld [vmem:[%s0 + $0x68] sm:$0xff]
    %v606 = vld [vmem:[%s0 + $0x70] sm:$0xff]
    %v607 = vld [vmem:[%s0 + $0x78] sm:$0xff]
    %608 = vmatprep.subr.mxu0 %v83
    %609 = vmatpush1.msra.mxu0 %v82
    %610 = vmatprep.subr.mxu0 %v79
    %611 = vmatpush1.msra.mxu0 %v78
    %612 = vmatprep.subr.mxu0 %v75
    %613 = vmatpush1.msra.mxu0 %v74
    %614 = vmatprep.subr.mxu0 %v71
    %615 = vmatpush1.msra.mxu0 %v70
    %616 = vmatprep.subr.mxu0 %v67
    %617 = vmatpush1.msra.mxu0 %v66
    %618 = vmatprep.subr.mxu0 %v63
    %619 = vmatpush1.msra.mxu0 %v62
    %620 = vmatprep.subr.mxu0 %v59
    %621 = vmatpush1.msra.mxu0 %v58
    %622 = vmatprep.subr.mxu0 %v55
    %623 = vmatpush1.msra.mxu0 %v54
    %624 = vmatprep.subr.mxu0 %v51
    %625 = vmatpush1.msra.mxu0 %v50
    %626 = vmatprep.subr.mxu0 %v47
    %627 = vmatpush1.msra.mxu0 %v46
    %628 = vmatprep.subr.mxu0 %v43
    %629 = vmatpush1.msra.mxu0 %v42
    %630 = vmatprep.subr.mxu0 %v39
    %631 = vmatpush1.msra.mxu0 %v38
    %632 = vmatprep.subr.mxu0 %v35
    %633 = vmatpush1.msra.mxu0 %v34
    %634 = vmatprep.subr.mxu0 %v31
    %635 = vmatpush1.msra.mxu0 %v30
    %636 = vmatprep.subr.mxu0 %v27
    %637 = vmatpush1.msra.mxu0 %v26
    %638 = vmatprep.subr.mxu0 %v23
    %639 = vmatpush1.msra.mxu0 %v22
    %640 = vmatprep.subr.mxu0 0.0
    %641 = vmatpush2.msra.mxu0 0.0
    %642 = vmatprep.subr.mxu0 0.0
    %643 = vmatpush2.msra.mxu0 0.0
    %644 = vmatprep.subr.mxu0 0.0
    %645 = vmatpush2.msra.mxu0 0.0
    %646 = vmatprep.subr.mxu0 0.0
    %647 = vmatpush2.msra.mxu0 0.0
    %648 = vmatprep.subr.mxu0 0.0
    %649 = vmatpush2.msra.mxu0 0.0
    %650 = vmatprep.subr.mxu0 0.0
    %651 = vmatpush2.msra.mxu0 0.0
    %652 = vmatprep.subr.mxu0 0.0
    %653 = vmatpush2.msra.mxu0 0.0
    %654 = vmatprep.subr.mxu0 0.0
    %655 = vmatpush2.msra.mxu0 0.0
    %656 = vmatprep.subr.mxu0 0.0
    %657 = vmatpush2.msra.mxu0 0.0
    %658 = vmatprep.subr.mxu0 0.0
    %659 = vmatpush2.msra.mxu0 0.0
    %660 = vmatprep.subr.mxu0 0.0
    %661 = vmatpush2.msra.mxu0 0.0
    %662 = vmatprep.subr.mxu0 0.0
    %663 = vmatpush2.msra.mxu0 0.0
    %664 = vmatprep.subr.mxu0 0.0
    %665 = vmatpush2.msra.mxu0 0.0
    %666 = vmatprep.subr.mxu0 0.0
    %667 = vmatpush2.msra.mxu0 0.0
    %668 = vmatprep.subr.mxu0 0.0
    %669 = vmatpush2.msra.mxu0 0.0
    %670 = vmatprep.subr.mxu0 0.0
    %671 = vmatpush2.msra.mxu0 0.0
    %672 = vmatprep.mubr.f32.mxu0 0.0
    %673 = vmatmul.mubr.f32.gmra.mxu0 %v603
    %v674 = vpop.f32.mrf.mxu0
    %v675 = vadd.f32 0.0, %v674
    %v676 = vpop.f32.mrf.mxu0
    %v677 = vadd.f32 0.0, %v676
    %678 = vdwg.mxu0
    %679 = vmatprep.subr.mxu0 %v85
    %680 = vmatpush1.msra.mxu0 %v84
    %681 = vmatprep.subr.mxu0 %v81
    %682 = vmatpush1.msra.mxu0 %v80
    %683 = vmatprep.subr.mxu0 %v77
    %684 = vmatpush1.msra.mxu0 %v76
    %685 = vmatprep.subr.mxu0 %v73
    %686 = vmatpush1.msra.mxu0 %v72
    %687 = vmatprep.subr.mxu0 %v69
    %688 = vmatpush1.msra.mxu0 %v68
    %689 = vmatprep.subr.mxu0 %v65
    %690 = vmatpush1.msra.mxu0 %v64
    %691 = vmatprep.subr.mxu0 %v61
    %692 = vmatpush1.msra.mxu0 %v60
    %693 = vmatprep.subr.mxu0 %v57
    %694 = vmatpush1.msra.mxu0 %v56
    %695 = vmatprep.subr.mxu0 %v53
    %696 = vmatpush1.msra.mxu0 %v52
    %697 = vmatprep.subr.mxu0 %v49
    %698 = vmatpush1.msra.mxu0 %v48
    %699 = vmatprep.subr.mxu0 %v45
    %700 = vmatpush1.msra.mxu0 %v44
    %701 = vmatprep.subr.mxu0 %v41
    %702 = vmatpush1.msra.mxu0 %v40
    %703 = vmatprep.subr.mxu0 %v37
    %704 = vmatpush1.msra.mxu0 %v36
    %705 = vmatprep.subr.mxu0 %v33
    %706 = vmatpush1.msra.mxu0 %v32
    %707 = vmatprep.subr.mxu0 %v29
    %708 = vmatpush1.msra.mxu0 %v28
    %709 = vmatprep.subr.mxu0 %v25
    %710 = vmatpush1.msra.mxu0 %v24
    %711 = vmatprep.subr.mxu0 0.0
    %712 = vmatpush2.msra.mxu0 0.0
    %713 = vmatprep.subr.mxu0 0.0
    %714 = vmatpush2.msra.mxu0 0.0
    %715 = vmatprep.subr.mxu0 0.0
    %716 = vmatpush2.msra.mxu0 0.0
    %717 = vmatprep.subr.mxu0 0.0
    %718 = vmatpush2.msra.mxu0 0.0
    %719 = vmatprep.subr.mxu0 0.0
    %720 = vmatpush2.msra.mxu0 0.0
    %721 = vmatprep.subr.mxu0 0.0
    %722 = vmatpush2.msra.mxu0 0.0
    %723 = vmatprep.subr.mxu0 0.0
    %724 = vmatpush2.msra.mxu0 0.0
    %725 = vmatprep.subr.mxu0 0.0
    %726 = vmatpush2.msra.mxu0 0.0
    %727 = vmatprep.subr.mxu0 0.0
    %728 = vmatpush2.msra.mxu0 0.0
    %729 = vmatprep.subr.mxu0 0.0
    %730 = vmatpush2.msra.mxu0 0.0
    %731 = vmatprep.subr.mxu0 0.0
    %732 = vmatpush2.msra.mxu0 0.0
    %733 = vmatprep.subr.mxu0 0.0
    %734 = vmatpush2.msra.mxu0 0.0
    %735 = vmatprep.subr.mxu0 0.0
    %736 = vmatpush2.msra.mxu0 0.0
    %737 = vmatprep.subr.mxu0 0.0
    %738 = vmatpush2.msra.mxu0 0.0
    %739 = vmatprep.subr.mxu0 0.0
    %740 = vmatpush2.msra.mxu0 0.0
    %741 = vmatprep.subr.mxu0 0.0
    %742 = vmatpush2.msra.mxu0 0.0
    %743 = vmatprep.mubr.f32.mxu0 0.0
    %744 = vmatmul.mubr.f32.gmra.mxu0 %v603
    %v745 = vpop.f32.mrf.mxu0
    %v746 = vadd.f32 0.0, %v745
    %v747 = vpop.f32.mrf.mxu0
    %v748 = vadd.f32 0.0, %v747
    %749 = vdwg.mxu0
    %v750 = vadd.f32 %v604, %v675
    %v751 = vadd.f32 %v605, %v677
    %v752 = vadd.f32 %v606, %v746
    %v753 = vadd.f32 %v607, %v748
    %v754 = vxor.u32 %v750, 2147483648
    %v755 = vmul.f32 %v754, 1.442695
    %v756 = vpow.pop %v755
    %v757 = vadd.f32 %v756, 1.0
    %v758 = vrcp.pop %v757
    %v759 = vmul.f32 1.0, %v758
    %v760 = vxor.u32 %v751, 2147483648
    %v761 = vmul.f32 %v760, 1.442695
    %v762 = vpow.pop %v761
    %v763 = vadd.f32 %v762, 1.0
    %v764 = vrcp.pop %v763
    %v765 = vmul.f32 1.0, %v764
    %v766 = vtanh.pop %v752
    %v767 = vxor.u32 %v753, 2147483648
    %v768 = vmul.f32 %v767, 1.442695
    %v769 = vpow.pop %v768
    %v770 = vadd.f32 %v769, 1.0
    %v771 = vrcp.pop %v770
    %v772 = vmul.f32 1.0, %v771
    %v773 = vmul.f32 %v765, %v601
    %v774 = vmul.f32 %v759, %v766
    %v775 = vadd.f32 %v773, %v774
    %v776 = vtanh.pop %v775
    %v777 = vmul.f32 %v772, %v776
    %v778 = vld [vmem:[%s0 + $0x80] sm:$0xff]
    %v779 = vld [vmem:[%s0 + $0x88] sm:$0xff]
    %v780 = vld [vmem:[%s0 + $0x90] sm:$0xff]
    %v781 = vld [vmem:[%s0 + $0x98] sm:$0xff]
    %782 = vmatprep.subr.mxu0 %v83
    %783 = vmatpush1.msra.mxu0 %v82
    %784 = vmatprep.subr.mxu0 %v79
    %785 = vmatpush1.msra.mxu0 %v78
    %786 = vmatprep.subr.mxu0 %v75
    %787 = vmatpush1.msra.mxu0 %v74
    %788 = vmatprep.subr.mxu0 %v71
    %789 = vmatpush1.msra.mxu0 %v70
    %790 = vmatprep.subr.mxu0 %v67
    %791 = vmatpush1.msra.mxu0 %v66
    %792 = vmatprep.subr.mxu0 %v63
    %793 = vmatpush1.msra.mxu0 %v62
    %794 = vmatprep.subr.mxu0 %v59
    %795 = vmatpush1.msra.mxu0 %v58
    %796 = vmatprep.subr.mxu0 %v55
    %797 = vmatpush1.msra.mxu0 %v54
    %798 = vmatprep.subr.mxu0 %v51
    %799 = vmatpush1.msra.mxu0 %v50
    %800 = vmatprep.subr.mxu0 %v47
    %801 = vmatpush1.msra.mxu0 %v46
    %802 = vmatprep.subr.mxu0 %v43
    %803 = vmatpush1.msra.mxu0 %v42
    %804 = vmatprep.subr.mxu0 %v39
    %805 = vmatpush1.msra.mxu0 %v38
    %806 = vmatprep.subr.mxu0 %v35
    %807 = vmatpush1.msra.mxu0 %v34
    %808 = vmatprep.subr.mxu0 %v31
    %809 = vmatpush1.msra.mxu0 %v30
    %810 = vmatprep.subr.mxu0 %v27
    %811 = vmatpush1.msra.mxu0 %v26
    %812 = vmatprep.subr.mxu0 %v23
    %813 = vmatpush1.msra.mxu0 %v22
    %814 = vmatprep.subr.mxu0 0.0
    %815 = vmatpush2.msra.mxu0 0.0
    %816 = vmatprep.subr.mxu0 0.0
    %817 = vmatpush2.msra.mxu0 0.0
    %818 = vmatprep.subr.mxu0 0.0
    %819 = vmatpush2.msra.mxu0 0.0
    %820 = vmatprep.subr.mxu0 0.0
    %821 = vmatpush2.msra.mxu0 0.0
    %822 = vmatprep.subr.mxu0 0.0
    %823 = vmatpush2.msra.mxu0 0.0
    %824 = vmatprep.subr.mxu0 0.0
    %825 = vmatpush2.msra.mxu0 0.0
    %826 = vmatprep.subr.mxu0 0.0
    %827 = vmatpush2.msra.mxu0 0.0
    %828 = vmatprep.subr.mxu0 0.0
    %829 = vmatpush2.msra.mxu0 0.0
    %830 = vmatprep.subr.mxu0 0.0
    %831 = vmatpush2.msra.mxu0 0.0
    %832 = vmatprep.subr.mxu0 0.0
    %833 = vmatpush2.msra.mxu0 0.0
    %834 = vmatprep.subr.mxu0 0.0
    %835 = vmatpush2.msra.mxu0 0.0
    %836 = vmatprep.subr.mxu0 0.0
    %837 = vmatpush2.msra.mxu0 0.0
    %838 = vmatprep.subr.mxu0 0.0
    %839 = vmatpush2.msra.mxu0 0.0
    %840 = vmatprep.subr.mxu0 0.0
    %841 = vmatpush2.msra.mxu0 0.0
    %842 = vmatprep.subr.mxu0 0.0
    %843 = vmatpush2.msra.mxu0 0.0
    %844 = vmatprep.subr.mxu0 0.0
    %845 = vmatpush2.msra.mxu0 0.0
    %846 = vmatprep.mubr.f32.mxu0 0.0
    %847 = vmatmul.mubr.f32.gmra.mxu0 %v777
    %v848 = vpop.f32.mrf.mxu0
    %v849 = vadd.f32 0.0, %v848
    %v850 = vpop.f32.mrf.mxu0
    %v851 = vadd.f32 0.0, %v850
    %852 = vdwg.mxu0
    %853 = vmatprep.subr.mxu0 %v85
    %854 = vmatpush1.msra.mxu0 %v84
    %855 = vmatprep.subr.mxu0 %v81
    %856 = vmatpush1.msra.mxu0 %v80
    %857 = vmatprep.subr.mxu0 %v77
    %858 = vmatpush1.msra.mxu0 %v76
    %859 = vmatprep.subr.mxu0 %v73
    %860 = vmatpush1.msra.mxu0 %v72
    %861 = vmatprep.subr.mxu0 %v69
    %862 = vmatpush1.msra.mxu0 %v68
    %863 = vmatprep.subr.mxu0 %v65
    %864 = vmatpush1.msra.mxu0 %v64
    %865 = vmatprep.subr.mxu0 %v61
    %866 = vmatpush1.msra.mxu0 %v60
    %867 = vmatprep.subr.mxu0 %v57
    %868 = vmatpush1.msra.mxu0 %v56
    %869 = vmatprep.subr.mxu0 %v53
    %870 = vmatpush1.msra.mxu0 %v52
    %871 = vmatprep.subr.mxu0 %v49
    %872 = vmatpush1.msra.mxu0 %v48
    %873 = vmatprep.subr.mxu0 %v45
    %874 = vmatpush1.msra.mxu0 %v44
    %875 = vmatprep.subr.mxu0 %v41
    %876 = vmatpush1.msra.mxu0 %v40
    %877 = vmatprep.subr.mxu0 %v37
    %878 = vmatpush1.msra.mxu0 %v36
    %879 = vmatprep.subr.mxu0 %v33
    %880 = vmatpush1.msra.mxu0 %v32
    %881 = vmatprep.subr.mxu0 %v29
    %882 = vmatpush1.msra.mxu0 %v28
    %883 = vmatprep.subr.mxu0 %v25
    %884 = vmatpush1.msra.mxu0 %v24
    %885 = vmatprep.subr.mxu0 0.0
    %886 = vmatpush2.msra.mxu0 0.0
    %887 = vmatprep.subr.mxu0 0.0
    %888 = vmatpush2.msra.mxu0 0.0
    %889 = vmatprep.subr.mxu0 0.0
    %890 = vmatpush2.msra.mxu0 0.0
    %891 = vmatprep.subr.mxu0 0.0
    %892 = vmatpush2.msra.mxu0 0.0
    %893 = vmatprep.subr.mxu0 0.0
    %894 = vmatpush2.msra.mxu0 0.0
    %895 = vmatprep.subr.mxu0 0.0
    %896 = vmatpush2.msra.mxu0 0.0
    %897 = vmatprep.subr.mxu0 0.0
    %898 = vmatpush2.msra.mxu0 0.0
    %899 = vmatprep.subr.mxu0 0.0
    %900 = vmatpush2.msra.mxu0 0.0
    %901 = vmatprep.subr.mxu0 0.0
    %902 = vmatpush2.msra.mxu0 0.0
    %903 = vmatprep.subr.mxu0 0.0
    %904 = vmatpush2.msra.mxu0 0.0
    %905 = vmatprep.subr.mxu0 0.0
    %906 = vmatpush2.msra.mxu0 0.0
    %907 = vmatprep.subr.mxu0 0.0
    %908 = vmatpush2.msra.mxu0 0.0
    %909 = vmatprep.subr.mxu0 0.0
    %910 = vmatpush2.msra.mxu0 0.0
    %911 = vmatprep.subr.mxu0 0.0
    %912 = vmatpush2.msra.mxu0 0.0
    %913 = vmatprep.subr.mxu0 0.0
    %914 = vmatpush2.msra.mxu0 0.0
    %915 = vmatprep.subr.mxu0 0.0
    %916 = vmatpush2.msra.mxu0 0.0
    %917 = vmatprep.mubr.f32.mxu0 0.0
    %918 = vmatmul.mubr.f32.gmra.mxu0 %v777
    %v919 = vpop.f32.mrf.mxu0
    %v920 = vadd.f32 0.0, %v919
    %v921 = vpop.f32.mrf.mxu0
    %v922 = vadd.f32 0.0, %v921
    %923 = vdwg.mxu0
    %v924 = vadd.f32 %v778, %v849
    %v925 = vadd.f32 %v779, %v851
    %v926 = vadd.f32 %v780, %v920
    %v927 = vadd.f32 %v781, %v922
    %v928 = vxor.u32 %v924, 2147483648
    %v929 = vmul.f32 %v928, 1.442695
    %v930 = vpow.pop %v929
    %v931 = vadd.f32 %v930, 1.0
    %v932 = vrcp.pop %v931
    %v933 = vmul.f32 1.0, %v932
    %v934 = vxor.u32 %v925, 2147483648
    %v935 = vmul.f32 %v934, 1.442695
    %v936 = vpow.pop %v935
    %v937 = vadd.f32 %v936, 1.0
    %v938 = vrcp.pop %v937
    %v939 = vmul.f32 1.0, %v938
    %v940 = vtanh.pop %v926
    %v941 = vxor.u32 %v927, 2147483648
    %v942 = vmul.f32 %v941, 1.442695
    %v943 = vpow.pop %v942
    %v944 = vadd.f32 %v943, 1.0
    %v945 = vrcp.pop %v944
    %v946 = vmul.f32 1.0, %v945
    %v947 = vmul.f32 %v939, %v775
    %v948 = vmul.f32 %v933, %v940
    %v949 = vadd.f32 %v947, %v948
    %v950 = vtanh.pop %v949
    %v951 = vmul.f32 %v946, %v950
    %v952 = vld [vmem:[%s0 + $0xa0] sm:$0xff]
    %v953 = vld [vmem:[%s0 + $0xa8] sm:$0xff]
    %v954 = vld [vmem:[%s0 + $0xb0] sm:$0xff]
    %v955 = vld [vmem:[%s0 + $0xb8] sm:$0xff]
    %956 = vmatprep.subr.mxu0 %v83
    %957 = vmatpush1.msra.mxu0 %v82
    %958 = vmatprep.subr.mxu0 %v79
    %959 = vmatpush1.msra.mxu0 %v78
    %960 = vmatprep.subr.mxu0 %v75
    %961 = vmatpush1.msra.mxu0 %v74
    %962 = vmatprep.subr.mxu0 %v71
    %963 = vmatpush1.msra.mxu0 %v70
    %964 = vmatprep.subr.mxu0 %v67
    %965 = vmatpush1.msra.mxu0 %v66
    %966 = vmatprep.subr.mxu0 %v63
    %967 = vmatpush1.msra.mxu0 %v62
    %968 = vmatprep.subr.mxu0 %v59
    %969 = vmatpush1.msra.mxu0 %v58
    %970 = vmatprep.subr.mxu0 %v55
    %971 = vmatpush1.msra.mxu0 %v54
    %972 = vmatprep.subr.mxu0 %v51
    %973 = vmatpush1.msra.mxu0 %v50
    %974 = vmatprep.subr.mxu0 %v47
    %975 = vmatpush1.msra.mxu0 %v46
    %976 = vmatprep.subr.mxu0 %v43
    %977 = vmatpush1.msra.mxu0 %v42
    %978 = vmatprep.subr.mxu0 %v39
    %979 = vmatpush1.msra.mxu0 %v38
    %980 = vmatprep.subr.mxu0 %v35
    %981 = vmatpush1.msra.mxu0 %v34
    %982 = vmatprep.subr.mxu0 %v31
    %983 = vmatpush1.msra.mxu0 %v30
    %984 = vmatprep.subr.mxu0 %v27
    %985 = vmatpush1.msra.mxu0 %v26
    %986 = vmatprep.subr.mxu0 %v23
    %987 = vmatpush1.msra.mxu0 %v22
    %988 = vmatprep.subr.mxu0 0.0
    %989 = vmatpush2.msra.mxu0 0.0
    %990 = vmatprep.subr.mxu0 0.0
    %991 = vmatpush2.msra.mxu0 0.0
    %992 = vmatprep.subr.mxu0 0.0
    %993 = vmatpush2.msra.mxu0 0.0
    %994 = vmatprep.subr.mxu0 0.0
    %995 = vmatpush2.msra.mxu0 0.0
    %996 = vmatprep.subr.mxu0 0.0
    %997 = vmatpush2.msra.mxu0 0.0
    %998 = vmatprep.subr.mxu0 0.0
    %999 = vmatpush2.msra.mxu0 0.0
    %1000 = vmatprep.subr.mxu0 0.0
    %1001 = vmatpush2.msra.mxu0 0.0
    %1002 = vmatprep.subr.mxu0 0.0
    %1003 = vmatpush2.msra.mxu0 0.0
    %1004 = vmatprep.subr.mxu0 0.0
    %1005 = vmatpush2.msra.mxu0 0.0
    %1006 = vmatprep.subr.mxu0 0.0
    %1007 = vmatpush2.msra.mxu0 0.0
    %1008 = vmatprep.subr.mxu0 0.0
    %1009 = vmatpush2.msra.mxu0 0.0
    %1010 = vmatprep.subr.mxu0 0.0
    %1011 = vmatpush2.msra.mxu0 0.0
    %1012 = vmatprep.subr.mxu0 0.0
    %1013 = vmatpush2.msra.mxu0 0.0
    %1014 = vmatprep.subr.mxu0 0.0
    %1015 = vmatpush2.msra.mxu0 0.0
    %1016 = vmatprep.subr.mxu0 0.0
    %1017 = vmatpush2.msra.mxu0 0.0
    %1018 = vmatprep.subr.mxu0 0.0
    %1019 = vmatpush2.msra.mxu0 0.0
    %1020 = vmatprep.mubr.f32.mxu0 0.0
    %1021 = vmatmul.mubr.f32.gmra.mxu0 %v951
    %v1022 = vpop.f32.mrf.mxu0
    %v1023 = vadd.f32 0.0, %v1022
    %v1024 = vpop.f32.mrf.mxu0
    %v1025 = vadd.f32 0.0, %v1024
    %1026 = vdwg.mxu0
    %1027 = vmatprep.subr.mxu0 %v85
    %1028 = vmatpush1.msra.mxu0 %v84
    %1029 = vmatprep.subr.mxu0 %v81
    %1030 = vmatpush1.msra.mxu0 %v80
    %1031 = vmatprep.subr.mxu0 %v77
    %1032 = vmatpush1.msra.mxu0 %v76
    %1033 = vmatprep.subr.mxu0 %v73
    %1034 = vmatpush1.msra.mxu0 %v72
    %1035 = vmatprep.subr.mxu0 %v69
    %1036 = vmatpush1.msra.mxu0 %v68
    %1037 = vmatprep.subr.mxu0 %v65
    %1038 = vmatpush1.msra.mxu0 %v64
    %1039 = vmatprep.subr.mxu0 %v61
    %1040 = vmatpush1.msra.mxu0 %v60
    %1041 = vmatprep.subr.mxu0 %v57
    %1042 = vmatpush1.msra.mxu0 %v56
    %1043 = vmatprep.subr.mxu0 %v53
    %1044 = vmatpush1.msra.mxu0 %v52
    %1045 = vmatprep.subr.mxu0 %v49
    %1046 = vmatpush1.msra.mxu0 %v48
    %1047 = vmatprep.subr.mxu0 %v45
    %1048 = vmatpush1.msra.mxu0 %v44
    %1049 = vmatprep.subr.mxu0 %v41
    %1050 = vmatpush1.msra.mxu0 %v40
    %1051 = vmatprep.subr.mxu0 %v37
    %1052 = vmatpush1.msra.mxu0 %v36
    %1053 = vmatprep.subr.mxu0 %v33
    %1054 = vmatpush1.msra.mxu0 %v32
    %1055 = vmatprep.subr.mxu0 %v29
    %1056 = vmatpush1.msra.mxu0 %v28
    %1057 = vmatprep.subr.mxu0 %v25
    %1058 = vmatpush1.msra.mxu0 %v24
    %1059 = vmatprep.subr.mxu0 0.0
    %1060 = vmatpush2.msra.mxu0 0.0
    %1061 = vmatprep.subr.mxu0 0.0
    %1062 = vmatpush2.msra.mxu0 0.0
    %1063 = vmatprep.subr.mxu0 0.0
    %1064 = vmatpush2.msra.mxu0 0.0
    %1065 = vmatprep.subr.mxu0 0.0
    %1066 = vmatpush2.msra.mxu0 0.0
    %1067 = vmatprep.subr.mxu0 0.0
    %1068 = vmatpush2.msra.mxu0 0.0
    %1069 = vmatprep.subr.mxu0 0.0
    %1070 = vmatpush2.msra.mxu0 0.0
    %1071 = vmatprep.subr.mxu0 0.0
    %1072 = vmatpush2.msra.mxu0 0.0
    %1073 = vmatprep.subr.mxu0 0.0
    %1074 = vmatpush2.msra.mxu0 0.0
    %1075 = vmatprep.subr.mxu0 0.0
    %1076 = vmatpush2.msra.mxu0 0.0
    %1077 = vmatprep.subr.mxu0 0.0
    %1078 = vmatpush2.msra.mxu0 0.0
    %1079 = vmatprep.subr.mxu0 0.0
    %1080 = vmatpush2.msra.mxu0 0.0
    %1081 = vmatprep.subr.mxu0 0.0
    %1082 = vmatpush2.msra.mxu0 0.0
    %1083 = vmatprep.subr.mxu0 0.0
    %1084 = vmatpush2.msra.mxu0 0.0
    %1085 = vmatprep.subr.mxu0 0.0
    %1086 = vmatpush2.msra.mxu0 0.0
    %1087 = vmatprep.subr.mxu0 0.0
    %1088 = vmatpush2.msra.mxu0 0.0
    %1089 = vmatprep.subr.mxu0 0.0
    %1090 = vmatpush2.msra.mxu0 0.0
    %1091 = vmatprep.mubr.f32.mxu0 0.0
    %1092 = vmatmul.mubr.f32.gmra.mxu0 %v951
    %v1093 = vpop.f32.mrf.mxu0
    %v1094 = vadd.f32 0.0, %v1093
    %v1095 = vpop.f32.mrf.mxu0
    %v1096 = vadd.f32 0.0, %v1095
    %1097 = vdwg.mxu0
    %v1098 = vadd.f32 %v952, %v1023
    %v1099 = vadd.f32 %v953, %v1025
    %v1100 = vadd.f32 %v954, %v1094
    %v1101 = vadd.f32 %v955, %v1096
    %v1102 = vxor.u32 %v1098, 2147483648
    %v1103 = vmul.f32 %v1102, 1.442695
    %v1104 = vpow.pop %v1103
    %v1105 = vadd.f32 %v1104, 1.0
    %v1106 = vrcp.pop %v1105
    %v1107 = vmul.f32 1.0, %v1106
    %v1108 = vxor.u32 %v1099, 2147483648
    %v1109 = vmul.f32 %v1108, 1.442695
    %v1110 = vpow.pop %v1109
    %v1111 = vadd.f32 %v1110, 1.0
    %v1112 = vrcp.pop %v1111
    %v1113 = vmul.f32 1.0, %v1112
    %v1114 = vtanh.pop %v1100
    %v1115 = vxor.u32 %v1101, 2147483648
    %v1116 = vmul.f32 %v1115, 1.442695
    %v1117 = vpow.pop %v1116
    %v1118 = vadd.f32 %v1117, 1.0
    %v1119 = vrcp.pop %v1118
    %v1120 = vmul.f32 1.0, %v1119
    %v1121 = vmul.f32 %v1113, %v949
    %v1122 = vmul.f32 %v1107, %v1114
    %v1123 = vadd.f32 %v1121, %v1122
    %v1124 = vtanh.pop %v1123
    %v1125 = vmul.f32 %v1120, %v1124
    %v1126 = vld [vmem:[%s0 + $0xc0] sm:$0xff]
    %v1127 = vld [vmem:[%s0 + $0xc8] sm:$0xff]
    %v1128 = vld [vmem:[%s0 + $0xd0] sm:$0xff]
    %v1129 = vld [vmem:[%s0 + $0xd8] sm:$0xff]
    %1130 = vmatprep.subr.mxu0 %v83
    %1131 = vmatpush1.msra.mxu0 %v82
    %1132 = vmatprep.subr.mxu0 %v79
    %1133 = vmatpush1.msra.mxu0 %v78
    %1134 = vmatprep.subr.mxu0 %v75
    %1135 = vmatpush1.msra.mxu0 %v74
    %1136 = vmatprep.subr.mxu0 %v71
    %1137 = vmatpush1.msra.mxu0 %v70
    %1138 = vmatprep.subr.mxu0 %v67
    %1139 = vmatpush1.msra.mxu0 %v66
    %1140 = vmatprep.subr.mxu0 %v63
    %1141 = vmatpush1.msra.mxu0 %v62
    %1142 = vmatprep.subr.mxu0 %v59
    %1143 = vmatpush1.msra.mxu0 %v58
    %1144 = vmatprep.subr.mxu0 %v55
    %1145 = vmatpush1.msra.mxu0 %v54
    %1146 = vmatprep.subr.mxu0 %v51
    %1147 = vmatpush1.msra.mxu0 %v50
    %1148 = vmatprep.subr.mxu0 %v47
    %1149 = vmatpush1.msra.mxu0 %v46
    %1150 = vmatprep.subr.mxu0 %v43
    %1151 = vmatpush1.msra.mxu0 %v42
    %1152 = vmatprep.subr.mxu0 %v39
    %1153 = vmatpush1.msra.mxu0 %v38
    %1154 = vmatprep.subr.mxu0 %v35
    %1155 = vmatpush1.msra.mxu0 %v34
    %1156 = vmatprep.subr.mxu0 %v31
    %1157 = vmatpush1.msra.mxu0 %v30
    %1158 = vmatprep.subr.mxu0 %v27
    %1159 = vmatpush1.msra.mxu0 %v26
    %1160 = vmatprep.subr.mxu0 %v23
    %1161 = vmatpush1.msra.mxu0 %v22
    %1162 = vmatprep.subr.mxu0 0.0
    %1163 = vmatpush2.msra.mxu0 0.0
    %1164 = vmatprep.subr.mxu0 0.0
    %1165 = vmatpush2.msra.mxu0 0.0
    %1166 = vmatprep.subr.mxu0 0.0
    %1167 = vmatpush2.msra.mxu0 0.0
    %1168 = vmatprep.subr.mxu0 0.0
    %1169 = vmatpush2.msra.mxu0 0.0
    %1170 = vmatprep.subr.mxu0 0.0
    %1171 = vmatpush2.msra.mxu0 0.0
    %1172 = vmatprep.subr.mxu0 0.0
    %1173 = vmatpush2.msra.mxu0 0.0
    %1174 = vmatprep.subr.mxu0 0.0
    %1175 = vmatpush2.msra.mxu0 0.0
    %1176 = vmatprep.subr.mxu0 0.0
    %1177 = vmatpush2.msra.mxu0 0.0
    %1178 = vmatprep.subr.mxu0 0.0
    %1179 = vmatpush2.msra.mxu0 0.0
    %1180 = vmatprep.subr.mxu0 0.0
    %1181 = vmatpush2.msra.mxu0 0.0
    %1182 = vmatprep.subr.mxu0 0.0
    %1183 = vmatpush2.msra.mxu0 0.0
    %1184 = vmatprep.subr.mxu0 0.0
    %1185 = vmatpush2.msra.mxu0 0.0
    %1186 = vmatprep.subr.mxu0 0.0
    %1187 = vmatpush2.msra.mxu0 0.0
    %1188 = vmatprep.subr.mxu0 0.0
    %1189 = vmatpush2.msra.mxu0 0.0
    %1190 = vmatprep.subr.mxu0 0.0
    %1191 = vmatpush2.msra.mxu0 0.0
    %1192 = vmatprep.subr.mxu0 0.0
    %1193 = vmatpush2.msra.mxu0 0.0
    %1194 = vmatprep.mubr.f32.mxu0 0.0
    %1195 = vmatmul.mubr.f32.gmra.mxu0 %v1125
    %v1196 = vpop.f32.mrf.mxu0
    %v1197 = vadd.f32 0.0, %v1196
    %v1198 = vpop.f32.mrf.mxu0
    %v1199 = vadd.f32 0.0, %v1198
    %1200 = vdwg.mxu0
    %1201 = vmatprep.subr.mxu0 %v85
    %1202 = vmatpush1.msra.mxu0 %v84
    %1203 = vmatprep.subr.mxu0 %v81
    %1204 = vmatpush1.msra.mxu0 %v80
    %1205 = vmatprep.subr.mxu0 %v77
    %1206 = vmatpush1.msra.mxu0 %v76
    %1207 = vmatprep.subr.mxu0 %v73
    %1208 = vmatpush1.msra.mxu0 %v72
    %1209 = vmatprep.subr.mxu0 %v69
    %1210 = vmatpush1.msra.mxu0 %v68
    %1211 = vmatprep.subr.mxu0 %v65
    %1212 = vmatpush1.msra.mxu0 %v64
    %1213 = vmatprep.subr.mxu0 %v61
    %1214 = vmatpush1.msra.mxu0 %v60
    %1215 = vmatprep.subr.mxu0 %v57
    %1216 = vmatpush1.msra.mxu0 %v56
    %1217 = vmatprep.subr.mxu0 %v53
    %1218 = vmatpush1.msra.mxu0 %v52
    %1219 = vmatprep.subr.mxu0 %v49
    %1220 = vmatpush1.msra.mxu0 %v48
    %1221 = vmatprep.subr.mxu0 %v45
    %1222 = vmatpush1.msra.mxu0 %v44
    %1223 = vmatprep.subr.mxu0 %v41
    %1224 = vmatpush1.msra.mxu0 %v40
    %1225 = vmatprep.subr.mxu0 %v37
    %1226 = vmatpush1.msra.mxu0 %v36
    %1227 = vmatprep.subr.mxu0 %v33
    %1228 = vmatpush1.msra.mxu0 %v32
    %1229 = vmatprep.subr.mxu0 %v29
    %1230 = vmatpush1.msra.mxu0 %v28
    %1231 = vmatprep.subr.mxu0 %v25
    %1232 = vmatpush1.msra.mxu0 %v24
    %1233 = vmatprep.subr.mxu0 0.0
    %1234 = vmatpush2.msra.mxu0 0.0
    %1235 = vmatprep.subr.mxu0 0.0
    %1236 = vmatpush2.msra.mxu0 0.0
    %1237 = vmatprep.subr.mxu0 0.0
    %1238 = vmatpush2.msra.mxu0 0.0
    %1239 = vmatprep.subr.mxu0 0.0
    %1240 = vmatpush2.msra.mxu0 0.0
    %1241 = vmatprep.subr.mxu0 0.0
    %1242 = vmatpush2.msra.mxu0 0.0
    %1243 = vmatprep.subr.mxu0 0.0
    %1244 = vmatpush2.msra.mxu0 0.0
    %1245 = vmatprep.subr.mxu0 0.0
    %1246 = vmatpush2.msra.mxu0 0.0
    %1247 = vmatprep.subr.mxu0 0.0
    %1248 = vmatpush2.msra.mxu0 0.0
    %1249 = vmatprep.subr.mxu0 0.0
    %1250 = vmatpush2.msra.mxu0 0.0
    %1251 = vmatprep.subr.mxu0 0.0
    %1252 = vmatpush2.msra.mxu0 0.0
    %1253 = vmatprep.subr.mxu0 0.0
    %1254 = vmatpush2.msra.mxu0 0.0
    %1255 = vmatprep.subr.mxu0 0.0
    %1256 = vmatpush2.msra.mxu0 0.0
    %1257 = vmatprep.subr.mxu0 0.0
    %1258 = vmatpush2.msra.mxu0 0.0
    %1259 = vmatprep.subr.mxu0 0.0
    %1260 = vmatpush2.msra.mxu0 0.0
    %1261 = vmatprep.subr.mxu0 0.0
    %1262 = vmatpush2.msra.mxu0 0.0
    %1263 = vmatprep.subr.mxu0 0.0
    %1264 = vmatpush2.msra.mxu0 0.0
    %1265 = vmatprep.mubr.f32.mxu0 0.0
    %1266 = vmatmul.mubr.f32.gmra.mxu0 %v1125
    %v1267 = vpop.f32.mrf.mxu0
    %v1268 = vadd.f32 0.0, %v1267
    %v1269 = vpop.f32.mrf.mxu0
    %v1270 = vadd.f32 0.0, %v1269
    %1271 = vdwg.mxu0
    %v1272 = vadd.f32 %v1126, %v1197
    %v1273 = vadd.f32 %v1127, %v1199
    %v1274 = vadd.f32 %v1128, %v1268
    %v1275 = vadd.f32 %v1129, %v1270
    %v1276 = vxor.u32 %v1272, 2147483648
    %v1277 = vmul.f32 %v1276, 1.442695
    %v1278 = vpow.pop %v1277
    %v1279 = vadd.f32 %v1278, 1.0
    %v1280 = vrcp.pop %v1279
    %v1281 = vmul.f32 1.0, %v1280
    %v1282 = vxor.u32 %v1273, 2147483648
    %v1283 = vmul.f32 %v1282, 1.442695
    %v1284 = vpow.pop %v1283
    %v1285 = vadd.f32 %v1284, 1.0
    %v1286 = vrcp.pop %v1285
    %v1287 = vmul.f32 1.0, %v1286
    %v1288 = vtanh.pop %v1274
    %v1289 = vxor.u32 %v1275, 2147483648
    %v1290 = vmul.f32 %v1289, 1.442695
    %v1291 = vpow.pop %v1290
    %v1292 = vadd.f32 %v1291, 1.0
    %v1293 = vrcp.pop %v1292
    %v1294 = vmul.f32 1.0, %v1293
    %v1295 = vmul.f32 %v1287, %v1123
    %v1296 = vmul.f32 %v1281, %v1288
    %v1297 = vadd.f32 %v1295, %v1296
    %v1298 = vtanh.pop %v1297
    %v1299 = vmul.f32 %v1294, %v1298
    %v1300 = vld [vmem:[%s0 + $0xe0] sm:$0xff]
    %v1301 = vld [vmem:[%s0 + $0xe8] sm:$0xff]
    %v1302 = vld [vmem:[%s0 + $0xf0] sm:$0xff]
    %v1303 = vld [vmem:[%s0 + $0xf8] sm:$0xff]
    %1304 = vmatprep.subr.mxu0 %v83
    %1305 = vmatpush1.msra.mxu0 %v82
    %1306 = vmatprep.subr.mxu0 %v79
    %1307 = vmatpush1.msra.mxu0 %v78
    %1308 = vmatprep.subr.mxu0 %v75
    %1309 = vmatpush1.msra.mxu0 %v74
    %1310 = vmatprep.subr.mxu0 %v71
    %1311 = vmatpush1.msra.mxu0 %v70
    %1312 = vmatprep.subr.mxu0 %v67
    %1313 = vmatpush1.msra.mxu0 %v66
    %1314 = vmatprep.subr.mxu0 %v63
    %1315 = vmatpush1.msra.mxu0 %v62
    %1316 = vmatprep.subr.mxu0 %v59
    %1317 = vmatpush1.msra.mxu0 %v58
    %1318 = vmatprep.subr.mxu0 %v55
    %1319 = vmatpush1.msra.mxu0 %v54
    %1320 = vmatprep.subr.mxu0 %v51
    %1321 = vmatpush1.msra.mxu0 %v50
    %1322 = vmatprep.subr.mxu0 %v47
    %1323 = vmatpush1.msra.mxu0 %v46
    %1324 = vmatprep.subr.mxu0 %v43
    %1325 = vmatpush1.msra.mxu0 %v42
    %1326 = vmatprep.subr.mxu0 %v39
    %1327 = vmatpush1.msra.mxu0 %v38
    %1328 = vmatprep.subr.mxu0 %v35
    %1329 = vmatpush1.msra.mxu0 %v34
    %1330 = vmatprep.subr.mxu0 %v31
    %1331 = vmatpush1.msra.mxu0 %v30
    %1332 = vmatprep.subr.mxu0 %v27
    %1333 = vmatpush1.msra.mxu0 %v26
    %1334 = vmatprep.subr.mxu0 %v23
    %1335 = vmatpush1.msra.mxu0 %v22
    %1336 = vmatprep.subr.mxu0 0.0
    %1337 = vmatpush2.msra.mxu0 0.0
    %1338 = vmatprep.subr.mxu0 0.0
    %1339 = vmatpush2.msra.mxu0 0.0
    %1340 = vmatprep.subr.mxu0 0.0
    %1341 = vmatpush2.msra.mxu0 0.0
    %1342 = vmatprep.subr.mxu0 0.0
    %1343 = vmatpush2.msra.mxu0 0.0
    %1344 = vmatprep.subr.mxu0 0.0
    %1345 = vmatpush2.msra.mxu0 0.0
    %1346 = vmatprep.subr.mxu0 0.0
    %1347 = vmatpush2.msra.mxu0 0.0
    %1348 = vmatprep.subr.mxu0 0.0
    %1349 = vmatpush2.msra.mxu0 0.0
    %1350 = vmatprep.subr.mxu0 0.0
    %1351 = vmatpush2.msra.mxu0 0.0
    %1352 = vmatprep.subr.mxu0 0.0
    %1353 = vmatpush2.msra.mxu0 0.0
    %1354 = vmatprep.subr.mxu0 0.0
    %1355 = vmatpush2.msra.mxu0 0.0
    %1356 = vmatprep.subr.mxu0 0.0
    %1357 = vmatpush2.msra.mxu0 0.0
    %1358 = vmatprep.subr.mxu0 0.0
    %1359 = vmatpush2.msra.mxu0 0.0
    %1360 = vmatprep.subr.mxu0 0.0
    %1361 = vmatpush2.msra.mxu0 0.0
    %1362 = vmatprep.subr.mxu0 0.0
    %1363 = vmatpush2.msra.mxu0 0.0
    %1364 = vmatprep.subr.mxu0 0.0
    %1365 = vmatpush2.msra.mxu0 0.0
    %1366 = vmatprep.subr.mxu0 0.0
    %1367 = vmatpush2.msra.mxu0 0.0
    %1368 = vmatprep.mubr.f32.mxu0 0.0
    %1369 = vmatmul.mubr.f32.gmra.mxu0 %v1299
    %v1370 = vpop.f32.mrf.mxu0
    %v1371 = vadd.f32 0.0, %v1370
    %v1372 = vpop.f32.mrf.mxu0
    %v1373 = vadd.f32 0.0, %v1372
    %1374 = vdwg.mxu0
    %1375 = vmatprep.subr.mxu0 %v85
    %1376 = vmatpush1.msra.mxu0 %v84
    %1377 = vmatprep.subr.mxu0 %v81
    %1378 = vmatpush1.msra.mxu0 %v80
    %1379 = vmatprep.subr.mxu0 %v77
    %1380 = vmatpush1.msra.mxu0 %v76
    %1381 = vmatprep.subr.mxu0 %v73
    %1382 = vmatpush1.msra.mxu0 %v72
    %1383 = vmatprep.subr.mxu0 %v69
    %1384 = vmatpush1.msra.mxu0 %v68
    %1385 = vmatprep.subr.mxu0 %v65
    %1386 = vmatpush1.msra.mxu0 %v64
    %1387 = vmatprep.subr.mxu0 %v61
    %1388 = vmatpush1.msra.mxu0 %v60
    %1389 = vmatprep.subr.mxu0 %v57
    %1390 = vmatpush1.msra.mxu0 %v56
    %1391 = vmatprep.subr.mxu0 %v53
    %1392 = vmatpush1.msra.mxu0 %v52
    %1393 = vmatprep.subr.mxu0 %v49
    %1394 = vmatpush1.msra.mxu0 %v48
    %1395 = vmatprep.subr.mxu0 %v45
    %1396 = vmatpush1.msra.mxu0 %v44
    %1397 = vmatprep.subr.mxu0 %v41
    %1398 = vmatpush1.msra.mxu0 %v40
    %1399 = vmatprep.subr.mxu0 %v37
    %1400 = vmatpush1.msra.mxu0 %v36
    %1401 = vmatprep.subr.mxu0 %v33
    %1402 = vmatpush1.msra.mxu0 %v32
    %1403 = vmatprep.subr.mxu0 %v29
    %1404 = vmatpush1.msra.mxu0 %v28
    %1405 = vmatprep.subr.mxu0 %v25
    %1406 = vmatpush1.msra.mxu0 %v24
    %1407 = vmatprep.subr.mxu0 0.0
    %1408 = vmatpush2.msra.mxu0 0.0
    %1409 = vmatprep.subr.mxu0 0.0
    %1410 = vmatpush2.msra.mxu0 0.0
    %1411 = vmatprep.subr.mxu0 0.0
    %1412 = vmatpush2.msra.mxu0 0.0
    %1413 = vmatprep.subr.mxu0 0.0
    %1414 = vmatpush2.msra.mxu0 0.0
    %1415 = vmatprep.subr.mxu0 0.0
    %1416 = vmatpush2.msra.mxu0 0.0
    %1417 = vmatprep.subr.mxu0 0.0
    %1418 = vmatpush2.msra.mxu0 0.0
    %1419 = vmatprep.subr.mxu0 0.0
    %1420 = vmatpush2.msra.mxu0 0.0
    %1421 = vmatprep.subr.mxu0 0.0
    %1422 = vmatpush2.msra.mxu0 0.0
    %1423 = vmatprep.subr.mxu0 0.0
    %1424 = vmatpush2.msra.mxu0 0.0
    %1425 = vmatprep.subr.mxu0 0.0
    %1426 = vmatpush2.msra.mxu0 0.0
    %1427 = vmatprep.subr.mxu0 0.0
    %1428 = vmatpush2.msra.mxu0 0.0
    %1429 = vmatprep.subr.mxu0 0.0
    %1430 = vmatpush2.msra.mxu0 0.0
    %1431 = vmatprep.subr.mxu0 0.0
    %1432 = vmatpush2.msra.mxu0 0.0
    %1433 = vmatprep.subr.mxu0 0.0
    %1434 = vmatpush2.msra.mxu0 0.0
    %1435 = vmatprep.subr.mxu0 0.0
    %1436 = vmatpush2.msra.mxu0 0.0
    %1437 = vmatprep.subr.mxu0 0.0
    %1438 = vmatpush2.msra.mxu0 0.0
    %1439 = vmatprep.mubr.f32.mxu0 0.0
    %1440 = vmatmul.mubr.f32.gmra.mxu0 %v1299
    %v1441 = vpop.f32.mrf.mxu0
    %v1442 = vadd.f32 0.0, %v1441
    %v1443 = vpop.f32.mrf.mxu0
    %v1444 = vadd.f32 0.0, %v1443
    %1445 = vdwg.mxu0
    %v1446 = vadd.f32 %v1300, %v1371
    %v1447 = vadd.f32 %v1301, %v1373
    %v1448 = vadd.f32 %v1302, %v1442
    %v1449 = vadd.f32 %v1303, %v1444
    %v1450 = vxor.u32 %v1446, 2147483648
    %v1451 = vmul.f32 %v1450, 1.442695
    %v1452 = vpow.pop %v1451
    %v1453 = vadd.f32 %v1452, 1.0
    %v1454 = vrcp.pop %v1453
    %v1455 = vmul.f32 1.0, %v1454
    %v1456 = vxor.u32 %v1447, 2147483648
    %v1457 = vmul.f32 %v1456, 1.442695
    %v1458 = vpow.pop %v1457
    %v1459 = vadd.f32 %v1458, 1.0
    %v1460 = vrcp.pop %v1459
    %v1461 = vmul.f32 1.0, %v1460
    %v1462 = vtanh.pop %v1448
    %v1463 = vxor.u32 %v1449, 2147483648
    %v1464 = vmul.f32 %v1463, 1.442695
    %v1465 = vpow.pop %v1464
    %v1466 = vadd.f32 %v1465, 1.0
    %v1467 = vrcp.pop %v1466
    %v1468 = vmul.f32 1.0, %v1467
    %v1469 = vmul.f32 %v1461, %v1297
    %v1470 = vmul.f32 %v1455, %v1462
    %v1471 = vadd.f32 %v1469, %v1470
    %v1472 = vtanh.pop %v1471
    %v1473 = vmul.f32 %v1468, %v1472
    %v1474 = vld [vmem:[%s2] sm:$0xff]
    %v1475 = vld [vmem:[%s2 + $0x8] sm:$0xff]
    %v1476 = vld [vmem:[%s2 + $0x10] sm:$0xff]
    %v1477 = vld [vmem:[%s2 + $0x18] sm:$0xff]
    %v1478 = vld [vmem:[%s2 + $0x20] sm:$0xff]
    %v1479 = vld [vmem:[%s2 + $0x28] sm:$0xff]
    %v1480 = vld [vmem:[%s2 + $0x30] sm:$0xff]
    %v1481 = vld [vmem:[%s2 + $0x38] sm:$0xff]
    %v1482 = vld [vmem:[%s2 + $0x40] sm:$0xff]
    %v1483 = vld [vmem:[%s2 + $0x48] sm:$0xff]
    %v1484 = vld [vmem:[%s2 + $0x50] sm:$0xff]
    %v1485 = vld [vmem:[%s2 + $0x58] sm:$0xff]
    %v1486 = vld [vmem:[%s2 + $0x60] sm:$0xff]
    %v1487 = vld [vmem:[%s2 + $0x68] sm:$0xff]
    %v1488 = vld [vmem:[%s2 + $0x70] sm:$0xff]
    %v1489 = vld [vmem:[%s2 + $0x78] sm:$0xff]
    %v1490 = vld [vmem:[%s3] sm:$0x1]
    %v1492 = vlaneseq
    %v1493 = vshrl.u32 %v1492, 7
    %v1494 = vsub.s32 0, %v1493
    %v1495 = vrot.slane %v1490, %v1494
    %1497 = vmatprep.subr.mxu0 0.0
    %1498 = vmatpush1.msra.mxu0 %v1489
    %1499 = vmatprep.subr.mxu0 0.0
    %1500 = vmatpush1.msra.mxu0 %v1488
    %1501 = vmatprep.subr.mxu0 0.0
    %1502 = vmatpush1.msra.mxu0 %v1487
    %1503 = vmatprep.subr.mxu0 0.0
    %1504 = vmatpush1.msra.mxu0 %v1486
    %1505 = vmatprep.subr.mxu0 0.0
    %1506 = vmatpush1.msra.mxu0 %v1485
    %1507 = vmatprep.subr.mxu0 0.0
    %1508 = vmatpush1.msra.mxu0 %v1484
    %1509 = vmatprep.subr.mxu0 0.0
    %1510 = vmatpush1.msra.mxu0 %v1483
    %1511 = vmatprep.subr.mxu0 0.0
    %1512 = vmatpush1.msra.mxu0 %v1482
    %1513 = vmatprep.subr.mxu0 0.0
    %1514 = vmatpush1.msra.mxu0 %v1481
    %1515 = vmatprep.subr.mxu0 0.0
    %1516 = vmatpush1.msra.mxu0 %v1480
    %1517 = vmatprep.subr.mxu0 0.0
    %1518 = vmatpush1.msra.mxu0 %v1479
    %1519 = vmatprep.subr.mxu0 0.0
    %1520 = vmatpush1.msra.mxu0 %v1478
    %1521 = vmatprep.subr.mxu0 0.0
    %1522 = vmatpush1.msra.mxu0 %v1477
    %1523 = vmatprep.subr.mxu0 0.0
    %1524 = vmatpush1.msra.mxu0 %v1476
    %1525 = vmatprep.subr.mxu0 0.0
    %1526 = vmatpush1.msra.mxu0 %v1475
    %1527 = vmatprep.subr.mxu0 0.0
    %1528 = vmatpush1.msra.mxu0 %v1474
    %1529 = vmatprep.subr.mxu0 0.0
    %1530 = vmatpush2.msra.mxu0 0.0
    %1531 = vmatprep.subr.mxu0 0.0
    %1532 = vmatpush2.msra.mxu0 0.0
    %1533 = vmatprep.subr.mxu0 0.0
    %1534 = vmatpush2.msra.mxu0 0.0
    %1535 = vmatprep.subr.mxu0 0.0
    %1536 = vmatpush2.msra.mxu0 0.0
    %1537 = vmatprep.subr.mxu0 0.0
    %1538 = vmatpush2.msra.mxu0 0.0
    %1539 = vmatprep.subr.mxu0 0.0
    %1540 = vmatpush2.msra.mxu0 0.0
    %1541 = vmatprep.subr.mxu0 0.0
    %1542 = vmatpush2.msra.mxu0 0.0
    %1543 = vmatprep.subr.mxu0 0.0
    %1544 = vmatpush2.msra.mxu0 0.0
    %1545 = vmatprep.subr.mxu0 0.0
    %1546 = vmatpush2.msra.mxu0 0.0
    %1547 = vmatprep.subr.mxu0 0.0
    %1548 = vmatpush2.msra.mxu0 0.0
    %1549 = vmatprep.subr.mxu0 0.0
    %1550 = vmatpush2.msra.mxu0 0.0
    %1551 = vmatprep.subr.mxu0 0.0
    %1552 = vmatpush2.msra.mxu0 0.0
    %1553 = vmatprep.subr.mxu0 0.0
    %1554 = vmatpush2.msra.mxu0 0.0
    %1555 = vmatprep.subr.mxu0 0.0
    %1556 = vmatpush2.msra.mxu0 0.0
    %1557 = vmatprep.subr.mxu0 0.0
    %1558 = vmatpush2.msra.mxu0 0.0
    %1559 = vmatprep.subr.mxu0 0.0
    %1560 = vmatpush2.msra.mxu0 0.0
    %1561 = vmatprep.mubr.f32.mxu0 0.0
    %1562 = vmatmul.mubr.f32.gmra.mxu0 %v1473
    %v1563 = vpop.f32.mrf.mxu0
    %v1564 = vadd.f32 %v1495, %v1563
    %v1565 = vpop.f32.mrf.mxu0
    %1566 = vdwg.mxu0
    %vm1567 = vcmask 130048
    %1568 = vst.msk [vmem:[#allocation2] sm:$0xff] %vm1567, %v1564
    // Predicated region
    $region18: #{lstm_encoder_forward.1} parent=1 // pred_check
      _
    $region19: #{lstm_encoder_forward.1} parent=1 // pred_check_branch
      %1570 = sbr.rel (0) target = $region21
    $region20: #{lstm_encoder_forward.1} parent=1 // pred_region
      %s1572 = ssub.s32 128, 128
      %1573 = vsyncadd [#allocation3], %s1572
      %s1575 = sshll.u32 [#allocation2], 4
      %s1576 = int_to_ptr.vmem [resolvable:$true] %s1575
      %1578 = dma.vmem_to_hbm [thread:$0]  %s1576, 128, %s4, [#allocation3]
    $region21: #{lstm_encoder_forward.1} parent=1 // pred_fallthru
      _
    // Predicated region
    $region22: #{lstm_encoder_forward.1} parent=1 // pred_check
      _
    $region23: #{lstm_encoder_forward.1} parent=1 // pred_check_branch
      %1580 = sbr.rel (0) target = $region25
    $region24: #{lstm_encoder_forward.1} parent=1 // pred_region
      %1581 = dma.done [#allocation3], 128
    $region25: #{lstm_encoder_forward.1} parent=1 // pred_fallthru
      _
    %1582 = vsyncpa [#allocation3], 1

</llo_original>
